<compile_context>
chip_gen: v7x
topology: tpu7x:2x2x1
jax: 0.10.0
libtpu: 0.0.40
codegen_flags: <defaults>
</compile_context>

<pallas_src>
import functools

import jax
import jax.numpy as jnp
from jax.experimental import pallas as pl
from jax.experimental.pallas import tpu as pltpu

MID_CHANNELS = 64    # module: self.mid_channels
OUT_CHANNELS = 256   # module: self.out_channels


# ---------------------------------------------------------------------------
# Pallas kernel: grid = (batch, num_key_blocks)
# ---------------------------------------------------------------------------
def _bam_kernel(boundary_ref, u_ref, w1s_ref, b1_ref, w2t_ref, wq_ref, wv_ref,
                gamma_ref, out_ref, q_s, acc_s, *, tk):
    k = pl.program_id(1)

    # ---- once per batch element: Q projection + accumulator reset ---------
    @pl.when(k == 0)
    def _init():
        u_bf = u_ref[...].astype(jnp.bfloat16)                     # (hw, cp_pad)
        q_s[...] = jnp.dot(u_bf, wq_ref[...],
                           preferred_element_type=jnp.float32
                           ).astype(jnp.bfloat16)                  # (hw, 256)
        acc_s[...] = jnp.zeros_like(acc_s)

    # ---- key branch, kept transposed: channels on sublanes, HW on lanes ---
    # BN folded into the first 1x1 conv (w1s = w1*bn_scale, b1 = bn_bias).
    bmap = boundary_ref[...]                                       # (1, tk)
    h1 = jnp.maximum(w1s_ref[...] * bmap + b1_ref[...], 0.0)       # (64, tk) f32
    # TODO(synk): Dropout2d(0.1) is identity at inference; training-mode
    # channel dropout is not implemented.
    key_t = jnp.dot(w2t_ref[...], h1.astype(jnp.bfloat16),
                    preferred_element_type=jnp.float32)            # (256, tk)

    # ---- energy block + exact per-key-column softmax ----------------------
    # energy[i, j] = <q_i, key_j>; softmax is over the query axis (axis 0),
    # so every key column is fully contained in this block -> exact softmax.
    energy = jnp.dot(q_s[...], key_t.astype(jnp.bfloat16),
                     preferred_element_type=jnp.float32)           # (hw, tk)
    m = jnp.max(energy, axis=0, keepdims=True)                     # (1, tk)
    e = jnp.exp(energy - m)                                        # f32 (v5e-safe)
    inv = pl.reciprocal(jnp.sum(e, axis=0, keepdims=True), approx=True)
    p = (e * inv).astype(jnp.bfloat16)                             # (hw, tk)

    # ---- V projection for this key block + out accumulation ---------------
    start = pl.multiple_of(k * tk, tk)
    uk = u_ref[pl.ds(start, tk), :].astype(jnp.bfloat16)           # (tk, cp_pad)
    vk = jnp.dot(uk, wv_ref[...],
                 preferred_element_type=jnp.float32
                 ).astype(jnp.bfloat16)                            # (tk, cp_pad)
    acc_s[...] += jnp.dot(p, vk, preferred_element_type=jnp.float32)

    # ---- finalize on the last key block ------------------------------------
    @pl.when(k == pl.num_programs(1) - 1)
    def _finalize():
        out_ref[...] = gamma_ref[0] * acc_s[...] + u_ref[...]


# ---------------------------------------------------------------------------
# Glue
# ---------------------------------------------------------------------------
def nearest_resize(x, out_h, out_w):
    """F.interpolate(..., mode='nearest') for NCHW inputs."""
    _, _, ih, iw = x.shape
    rows = (jnp.arange(out_h) * ih // out_h).astype(jnp.int32)
    cols = (jnp.arange(out_w) * iw // out_w).astype(jnp.int32)
    return x[:, :, rows[:, None], cols[None, :]]


def boundary_attention(boundary_map, uncertainty_map, params, tk=None):
    b, cp, h, w = uncertainty_map.shape
    hw = h * w
    cp_pad = ((cp + 127) // 128) * 128          # lane-dense channel dim

    # key-axis tile size: keep the (hw, tk) energy/exp temporaries VMEM-sane.
    if tk is None:
        budget = 24 * 1024 * 1024               # rough cap for f32 temporaries
        for cand in (1024, 512, 256, 128):
            if hw % cand == 0 and 3 * hw * cand * 4 <= budget:
                tk = cand
                break
        else:
            tk = 128 if hw % 128 == 0 else hw
    assert hw % tk == 0
    nk = hw // tk

    bm = nearest_resize(boundary_map.astype(jnp.float32), h, w)    # (b,1,h,w)
    bm_flat = bm.reshape(b, 1, hw)                                 # lane-dense

    u = uncertainty_map.astype(jnp.float32).reshape(b, cp, hw)
    u = u.transpose(0, 2, 1)                                       # (b,hw,cp)
    u_pad = jnp.pad(u, ((0, 0), (0, 0), (0, cp_pad - cp)))         # (b,hw,cp_pad)

    # weight repacking (zero-padding keeps the math exact); BN folded into w1
    w1s_col = (params["w1"] * params["bn_scale"]).reshape(MID_CHANNELS, 1)
    b1_col = params["bn_bias"].reshape(MID_CHANNELS, 1)
    w2_t = params["w2"].T.astype(jnp.bfloat16)                     # (256,64)
    wq_pad = jnp.pad(params["wq"], ((0, cp_pad - cp), (0, 0))
                     ).astype(jnp.bfloat16)                        # (cp_pad,256)
    wv_pad = jnp.pad(params["wv"], ((0, cp_pad - cp), (0, cp_pad - cp))
                     ).astype(jnp.bfloat16)                        # (cp_pad,cp_pad)
    gamma = params["gamma"].reshape(1)

    kernel = functools.partial(_bam_kernel, tk=tk)

    out_pad = pl.pallas_call(
        kernel,
        out_shape=jax.ShapeDtypeStruct((b, hw, cp_pad), jnp.float32),
        grid_spec=pltpu.PrefetchScalarGridSpec(
            num_scalar_prefetch=0,
            grid=(b, nk),
            in_specs=[
                pl.BlockSpec((None, 1, tk), lambda i, k: (i, 0, k)),        # boundary
                pl.BlockSpec((None, hw, cp_pad), lambda i, k: (i, 0, 0)),   # uncertainty
                pl.BlockSpec((MID_CHANNELS, 1), lambda i, k: (0, 0)),       # w1*bn_scale
                pl.BlockSpec((MID_CHANNELS, 1), lambda i, k: (0, 0)),       # bn_bias
                pl.BlockSpec((OUT_CHANNELS, MID_CHANNELS), lambda i, k: (0, 0)),  # w2^T
                pl.BlockSpec((cp_pad, OUT_CHANNELS), lambda i, k: (0, 0)),  # wq
                pl.BlockSpec((cp_pad, cp_pad), lambda i, k: (0, 0)),        # wv
                pl.BlockSpec(memory_space=pltpu.MemorySpace.SMEM),          # gamma
            ],
            out_specs=pl.BlockSpec((None, hw, cp_pad), lambda i, k: (i, 0, 0)),
            scratch_shapes=[
                pltpu.VMEM((hw, OUT_CHANNELS), jnp.bfloat16),   # Q (per batch)
                pltpu.VMEM((hw, cp_pad), jnp.float32),          # out accumulator
            ],
        ),
        compiler_params=pltpu.CompilerParams(
            dimension_semantics=("parallel", "arbitrary"),
            vmem_limit_bytes=48 * 1024 * 1024),
    )(bm_flat, u_pad, w1s_col, b1_col, w2_t, wq_pad, wv_pad, gamma)

    out = out_pad[:, :, :cp]                                       # drop pad
    return out.transpose(0, 2, 1).reshape(b, cp, h, w)             # NCHW


# ---------------------------------------------------------------------------
# Pure-JAX reference for validation (unfused BN, f32 everywhere)
# ---------------------------------------------------------------------------
def boundary_attention_ref(boundary_map, uncertainty_map, params):
    b, cp, h, w = uncertainty_map.shape
    hw = h * w
    bm = nearest_resize(boundary_map.astype(jnp.float32), h, w)
    x = bm.reshape(b, 1, hw).transpose(0, 2, 1)                    # (b,hw,1)
    h1 = x * params["w1"][None]
    h1 = h1 * params["bn_scale"][None] + params["bn_bias"][None]
    h1 = jnp.maximum(h1, 0.0)
    key = jnp.einsum("bnm,mo->bno", h1, params["w2"])              # (b,hw,256)
    u = uncertainty_map.astype(jnp.float32).reshape(b, cp, hw).transpose(0, 2, 1)
    q = jnp.einsum("bnc,co->bno", u, params["wq"])
    v = jnp.einsum("bnc,cd->bnd", u, params["wv"])
    energy = jnp.einsum("bio,bjo->bij", q, key)                    # (b,hw,hw)
    attn = jax.nn.softmax(energy, axis=1)                          # dim=1 !
    out = jnp.einsum("bij,bjd->bid", attn, v)
    out = params["gamma"][0, 0] * out + u
    return out.transpose(0, 2, 1).reshape(b, cp, h, w)


# ---------------------------------------------------------------------------
# Deterministic parameter init (shapes follow the module's __init__)
# ---------------------------------------------------------------------------
def init_params(key, proj_dim, gamma_value=0.0):
    k1, k2, k3, k4 = jax.random.split(key, 4)
    # 1x1 conv weights stored as (C_in, C_out) matmul weights
    w1 = 0.05 * jax.random.normal(k1, (1, MID_CHANNELS), jnp.float32)
    w2 = 0.05 * jax.random.normal(k2, (MID_CHANNELS, OUT_CHANNELS), jnp.float32)
    wq = 0.05 * jax.random.normal(k3, (proj_dim, OUT_CHANNELS), jnp.float32)
    wv = 0.05 * jax.random.normal(k4, (proj_dim, proj_dim), jnp.float32)
    # BN folded (default torch init: weight=1, bias=0, mean=0, var=1, eps=1e-5)
    eps = 1e-5
    bn_scale = jnp.full((1, MID_CHANNELS), 1.0 / jnp.sqrt(1.0 + eps), jnp.float32)
    bn_bias = jnp.zeros((1, MID_CHANNELS), jnp.float32)
    gamma = jnp.full((1, 1), gamma_value, jnp.float32)   # nn.Parameter(torch.zeros(1))
    return dict(w1=w1, w2=w2, wq=wq, wv=wv,
                bn_scale=bn_scale, bn_bias=bn_bias, gamma=gamma)


if __name__ == "__main__":
    B, PROJ_DIM, H, W = 2, 32, 16, 16
    key = jax.random.PRNGKey(0)
    kb, ku, kp = jax.random.split(key, 3)

    boundary_map = jax.random.normal(kb, (B, 1, 8, 8), jnp.float32)       # lower res
    uncertainty_map = jax.random.normal(ku, (B, PROJ_DIM, H, W), jnp.float32)

    # module-faithful init (gamma = 0): residual path must be exact
    params = init_params(kp, PROJ_DIM, gamma_value=0.0)
    out = boundary_attention(boundary_map, uncertainty_map, params, tk=128)
    jax.block_until_ready(out)
    ref = boundary_attention_ref(boundary_map, uncertainty_map, params)
    assert jnp.allclose(out, ref, rtol=1e-4, atol=1e-4)

    # gamma != 0 exercises the attention branch (bf16 MXU + approx reciprocal
    # => slightly looser tolerance vs the f32 reference)
    params_g = dict(params, gamma=jnp.full((1, 1), 0.5, jnp.float32))
    out_g = boundary_attention(boundary_map, uncertainty_map, params_g, tk=128)
    jax.block_until_ready(out_g)
    ref_g = boundary_attention_ref(boundary_map, uncertainty_map, params_g)
    assert jnp.allclose(out_g, ref_g, rtol=2e-2, atol=2e-2)

    print("KERNEL_OK")
</pallas_src>

<mosaic_0001>
module attributes {stable_mosaic.version = 11 : i64} {
  func.func @_bam_kernel(%arg0: i32, %arg1: i32, %arg2: memref<1x1x128xf32, #tpu.memory_space<vmem>>, %arg3: memref<1x256x128xf32, #tpu.memory_space<vmem>>, %arg4: memref<64x1xf32, #tpu.memory_space<vmem>>, %arg5: memref<64x1xf32, #tpu.memory_space<vmem>>, %arg6: memref<256x64xbf16, #tpu.memory_space<vmem>>, %arg7: memref<128x256xbf16, #tpu.memory_space<vmem>>, %arg8: memref<128x128xbf16, #tpu.memory_space<vmem>>, %arg9: memref<1xf32, #tpu.memory_space<smem>>, %arg10: memref<1x256x128xf32, #tpu.memory_space<vmem>>, %arg11: memref<256x256xbf16, #tpu.memory_space<vmem>>, %arg12: memref<256x128xf32, #tpu.memory_space<vmem>>) attributes {dimension_semantics = [#tpu.dimension_semantics<parallel>, #tpu.dimension_semantics<arbitrary>], iteration_bounds = array<i64: 2, 2>, scalar_prefetch = 0 : i64, scratch_operands = 2 : i64, tpu.core_type = #tpu.core_type<tc>, window_params = [{transform_indices = @transform_0, window_bounds = array<i64: 1, 1, 128>}, {transform_indices = @transform_1, window_bounds = array<i64: 1, 256, 128>}, {pipeline_mode = #tpu.pipeline_mode<synchronous>, transform_indices = @transform_2, window_bounds = array<i64: 64, 1>}, {pipeline_mode = #tpu.pipeline_mode<synchronous>, transform_indices = @transform_3, window_bounds = array<i64: 64, 1>}, {pipeline_mode = #tpu.pipeline_mode<synchronous>, transform_indices = @transform_4, window_bounds = array<i64: 256, 64>}, {pipeline_mode = #tpu.pipeline_mode<synchronous>, transform_indices = @transform_5, window_bounds = array<i64: 128, 256>}, {pipeline_mode = #tpu.pipeline_mode<synchronous>, transform_indices = @transform_6, window_bounds = array<i64: 128, 128>}, {transform_indices = @transform_7, window_bounds = array<i64: 1>}, {transform_indices = @transform_8, window_bounds = array<i64: 1, 256, 128>}]} {
    %c0_i32 = arith.constant 0 : i32
    %0 = arith.cmpi eq, %arg1, %c0_i32 : i32
    %1 = arith.extui %0 : i1 to i32
    %c0_i32_0 = arith.constant 0 : i32
    %2 = arith.cmpi ne, %1, %c0_i32_0 : i32
    scf.if %2 {
      %c0_26 = arith.constant 0 : index
      %c0_27 = arith.constant 0 : index
      %c0_28 = arith.constant 0 : index
      %47 = vector.load %arg3[%c0_26, %c0_27, %c0_28] : memref<1x256x128xf32, #tpu.memory_space<vmem>>, vector<1x256x128xf32>
      %48 = vector.shape_cast %47 : vector<1x256x128xf32> to vector<256x128xf32>
      %49 = arith.truncf %48 : vector<256x128xf32> to vector<256x128xbf16>
      %c0_29 = arith.constant 0 : index
      %c0_30 = arith.constant 0 : index
      %50 = vector.load %arg7[%c0_29, %c0_30] : memref<128x256xbf16, #tpu.memory_space<vmem>>, vector<128x256xbf16>
      %cst_31 = arith.constant dense<0.000000e+00> : vector<256x256xf32>
      %51 = tpu.matmul %49, %50, %cst_31 {dimension_numbers = #tpu.dot_dimension_numbers<[1], [0], [0], [1], [0, 0, 1, 1], [], []>} : vector<256x128xbf16>, vector<128x256xbf16>, vector<256x256xf32> -> vector<256x256xf32>
      %52 = arith.truncf %51 : vector<256x256xf32> to vector<256x256xbf16>
      %c0_32 = arith.constant 0 : index
      %c0_33 = arith.constant 0 : index
      %53 = vector.load %arg11[%c0_32, %c0_33] : memref<256x256xbf16, #tpu.memory_space<vmem>>, vector<256x256xbf16>
      tpu.vector_store %arg11[%c0_32, %c0_33], %52 {strides = array<i32>} : memref<256x256xbf16, #tpu.memory_space<vmem>>, vector<256x256xbf16>,
      %cst_34 = arith.constant 0.000000e+00 : f32
      %54 = vector.broadcast %cst_34 : f32 to vector<256x128xf32>
      %c0_35 = arith.constant 0 : index
      %c0_36 = arith.constant 0 : index
      %55 = vector.load %arg12[%c0_35, %c0_36] : memref<256x128xf32, #tpu.memory_space<vmem>>, vector<256x128xf32>
      tpu.vector_store %arg12[%c0_35, %c0_36], %54 {strides = array<i32>} : memref<256x128xf32, #tpu.memory_space<vmem>>, vector<256x128xf32>,
    } else {
    }
    %c0 = arith.constant 0 : index
    %c0_1 = arith.constant 0 : index
    %c0_2 = arith.constant 0 : index
    %3 = vector.load %arg2[%c0, %c0_1, %c0_2] : memref<1x1x128xf32, #tpu.memory_space<vmem>>, vector<1x1x128xf32>
    %4 = vector.shape_cast %3 : vector<1x1x128xf32> to vector<1x128xf32>
    %c0_3 = arith.constant 0 : index
    %c0_4 = arith.constant 0 : index
    %5 = vector.load %arg4[%c0_3, %c0_4] : memref<64x1xf32, #tpu.memory_space<vmem>>, vector<64x1xf32>
    %6 = vector.broadcast %5 : vector<64x1xf32> to vector<64x128xf32>
    %7 = vector.broadcast %4 : vector<1x128xf32> to vector<64x128xf32>
    %8 = arith.mulf %6, %7 : vector<64x128xf32>
    %c0_5 = arith.constant 0 : index
    %c0_6 = arith.constant 0 : index
    %9 = vector.load %arg5[%c0_5, %c0_6] : memref<64x1xf32, #tpu.memory_space<vmem>>, vector<64x1xf32>
    %10 = vector.broadcast %9 : vector<64x1xf32> to vector<64x128xf32>
    %11 = arith.addf %8, %10 : vector<64x128xf32>
    %cst = arith.constant 0.000000e+00 : f32
    %12 = vector.broadcast %cst : f32 to vector<64x128xf32>
    %13 = arith.maximumf %11, %12 : vector<64x128xf32>
    %c0_7 = arith.constant 0 : index
    %c0_8 = arith.constant 0 : index
    %14 = vector.load %arg6[%c0_7, %c0_8] : memref<256x64xbf16, #tpu.memory_space<vmem>>, vector<256x64xbf16>
    %15 = arith.truncf %13 : vector<64x128xf32> to vector<64x128xbf16>
    %cst_9 = arith.constant dense<0.000000e+00> : vector<256x128xf32>
    %16 = tpu.matmul %14, %15, %cst_9 {dimension_numbers = #tpu.dot_dimension_numbers<[1], [0], [0], [1], [0, 0, 1, 1], [], []>} : vector<256x64xbf16>, vector<64x128xbf16>, vector<256x128xf32> -> vector<256x128xf32>
    %c0_10 = arith.constant 0 : index
    %c0_11 = arith.constant 0 : index
    %17 = vector.load %arg11[%c0_10, %c0_11] : memref<256x256xbf16, #tpu.memory_space<vmem>>, vector<256x256xbf16>
    %18 = arith.truncf %16 : vector<256x128xf32> to vector<256x128xbf16>
    %cst_12 = arith.constant dense<0.000000e+00> : vector<256x128xf32>
    %19 = tpu.matmul %17, %18, %cst_12 {dimension_numbers = #tpu.dot_dimension_numbers<[1], [0], [0], [1], [0, 0, 1, 1], [], []>} : vector<256x256xbf16>, vector<256x128xbf16>, vector<256x128xf32> -> vector<256x128xf32>
    %cst_13 = arith.constant dense<0xFF800000> : vector<128xf32>
    %20 = vector.multi_reduction <maximumf>, %19, %cst_13 [0] : vector<256x128xf32> to vector<128xf32>
    %21 = vector.shape_cast %20 : vector<128xf32> to vector<1x128xf32>
    %22 = vector.broadcast %21 : vector<1x128xf32> to vector<256x128xf32>
    %23 = arith.subf %19, %22 : vector<256x128xf32>
    %24 = math.exp %23 : vector<256x128xf32>
    %cst_14 = arith.constant dense<0.000000e+00> : vector<128xf32>
    %25 = vector.multi_reduction <add>, %24, %cst_14 [0] : vector<256x128xf32> to vector<128xf32>
    %26 = vector.shape_cast %25 : vector<128xf32> to vector<1x128xf32>
    %27 = tpu.reciprocal %26 {approx = true} : vector<1x128xf32> -> vector<1x128xf32>
    %28 = vector.broadcast %27 : vector<1x128xf32> to vector<256x128xf32>
    %29 = arith.mulf %24, %28 : vector<256x128xf32>
    %30 = arith.truncf %29 : vector<256x128xf32> to vector<256x128xbf16>
    %c128_i32 = arith.constant 128 : i32
    %31 = arith.muli %arg1, %c128_i32 : i32
    %32 = tpu.assume_multiple %31, 128 : i32
    %c0_15 = arith.constant 0 : index
    %33 = arith.index_cast %32 : i32 to index
    %c0_16 = arith.constant 0 : index
    %34 = vector.load %arg3[%c0_15, %33, %c0_16] : memref<1x256x128xf32, #tpu.memory_space<vmem>>, vector<1x128x128xf32>
    %35 = vector.shape_cast %34 : vector<1x128x128xf32> to vector<128x128xf32>
    %36 = arith.truncf %35 : vector<128x128xf32> to vector<128x128xbf16>
    %c0_17 = arith.constant 0 : index
    %c0_18 = arith.constant 0 : index
    %37 = vector.load %arg8[%c0_17, %c0_18] : memref<128x128xbf16, #tpu.memory_space<vmem>>, vector<128x128xbf16>
    %cst_19 = arith.constant dense<0.000000e+00> : vector<128x128xf32>
    %38 = tpu.matmul %36, %37, %cst_19 {dimension_numbers = #tpu.dot_dimension_numbers<[1], [0], [0], [1], [0, 0, 1, 1], [], []>} : vector<128x128xbf16>, vector<128x128xbf16>, vector<128x128xf32> -> vector<128x128xf32>
    %39 = arith.truncf %38 : vector<128x128xf32> to vector<128x128xbf16>
    %c0_20 = arith.constant 0 : index
    %c0_21 = arith.constant 0 : index
    %40 = vector.load %arg12[%c0_20, %c0_21] : memref<256x128xf32, #tpu.memory_space<vmem>>, vector<256x128xf32>
    %cst_22 = arith.constant dense<0.000000e+00> : vector<256x128xf32>
    %41 = tpu.matmul %30, %39, %cst_22 {dimension_numbers = #tpu.dot_dimension_numbers<[1], [0], [0], [1], [0, 0, 1, 1], [], []>} : vector<256x128xbf16>, vector<128x128xbf16>, vector<256x128xf32> -> vector<256x128xf32>
    %42 = arith.addf %40, %41 : vector<256x128xf32>
    %c0_23 = arith.constant 0 : index
    %c0_24 = arith.constant 0 : index
    %43 = vector.load %arg12[%c0_23, %c0_24] : memref<256x128xf32, #tpu.memory_space<vmem>>, vector<256x128xf32>
    tpu.vector_store %arg12[%c0_23, %c0_24], %42 {strides = array<i32>} : memref<256x128xf32, #tpu.memory_space<vmem>>, vector<256x128xf32>,
    %c1_i32 = arith.constant 1 : i32
    %44 = arith.cmpi eq, %arg1, %c1_i32 : i32
    %45 = arith.extui %44 : i1 to i32
    %c0_i32_25 = arith.constant 0 : i32
    %46 = arith.cmpi ne, %45, %c0_i32_25 : i32
    scf.if %46 {
      %c0_26 = arith.constant 0 : index
      %47 = memref.load %arg9[%c0_26] : memref<1xf32, #tpu.memory_space<smem>>
      %c0_27 = arith.constant 0 : index
      %c0_28 = arith.constant 0 : index
      %48 = vector.load %arg12[%c0_27, %c0_28] : memref<256x128xf32, #tpu.memory_space<vmem>>, vector<256x128xf32>
      %49 = vector.broadcast %47 : f32 to vector<256x128xf32>
      %50 = arith.mulf %49, %48 : vector<256x128xf32>
      %c0_29 = arith.constant 0 : index
      %c0_30 = arith.constant 0 : index
      %c0_31 = arith.constant 0 : index
      %51 = vector.load %arg3[%c0_29, %c0_30, %c0_31] : memref<1x256x128xf32, #tpu.memory_space<vmem>>, vector<1x256x128xf32>
      %52 = vector.shape_cast %51 : vector<1x256x128xf32> to vector<256x128xf32>
      %53 = arith.addf %50, %52 : vector<256x128xf32>
      %c0_32 = arith.constant 0 : index
      %c0_33 = arith.constant 0 : index
      %c0_34 = arith.constant 0 : index
      %54 = vector.load %arg10[%c0_32, %c0_33, %c0_34] : memref<1x256x128xf32, #tpu.memory_space<vmem>>, vector<1x256x128xf32>
      %55 = vector.shape_cast %54 : vector<1x256x128xf32> to vector<256x128xf32>
      %56 = vector.shape_cast %53 : vector<256x128xf32> to vector<1x256x128xf32>
      tpu.vector_store %arg10[%c0_32, %c0_33, %c0_34], %56 {strides = array<i32>} : memref<1x256x128xf32, #tpu.memory_space<vmem>>, vector<1x256x128xf32>,
    } else {
    }
    return
  }
  func.func @transform_0(%arg0: i32, %arg1: i32) -> (i32, i32, i32) {
    %c0_i32 = arith.constant 0 : i32
    %c0_i32_0 = arith.constant 0 : i32
    return %arg0, %c0_i32, %arg1 : i32, i32, i32
  }
  func.func @transform_1(%arg0: i32, %arg1: i32) -> (i32, i32, i32) {
    %c0_i32 = arith.constant 0 : i32
    %c0_i32_0 = arith.constant 0 : i32
    %c0_i32_1 = arith.constant 0 : i32
    return %arg0, %c0_i32, %c0_i32_0 : i32, i32, i32
  }
  func.func @transform_2(%arg0: i32, %arg1: i32) -> (i32, i32) {
    %c0_i32 = arith.constant 0 : i32
    %c0_i32_0 = arith.constant 0 : i32
    %c0_i32_1 = arith.constant 0 : i32
    return %c0_i32, %c0_i32_0 : i32, i32
  }
  func.func @transform_3(%arg0: i32, %arg1: i32) -> (i32, i32) {
    %c0_i32 = arith.constant 0 : i32
    %c0_i32_0 = arith.constant 0 : i32
    %c0_i32_1 = arith.constant 0 : i32
    return %c0_i32, %c0_i32_0 : i32, i32
  }
  func.func @transform_4(%arg0: i32, %arg1: i32) -> (i32, i32) {
    %c0_i32 = arith.constant 0 : i32
    %c0_i32_0 = arith.constant 0 : i32
    %c0_i32_1 = arith.constant 0 : i32
    return %c0_i32, %c0_i32_0 : i32, i32
  }
  func.func @transform_5(%arg0: i32, %arg1: i32) -> (i32, i32) {
    %c0_i32 = arith.constant 0 : i32
    %c0_i32_0 = arith.constant 0 : i32
    %c0_i32_1 = arith.constant 0 : i32
    return %c0_i32, %c0_i32_0 : i32, i32
  }
  func.func @transform_6(%arg0: i32, %arg1: i32) -> (i32, i32) {
    %c0_i32 = arith.constant 0 : i32
    %c0_i32_0 = arith.constant 0 : i32
    %c0_i32_1 = arith.constant 0 : i32
    return %c0_i32, %c0_i32_0 : i32, i32
  }
  func.func @transform_7(%arg0: i32, %arg1: i32) -> i32 {
    %c0_i32 = arith.constant 0 : i32
    %c0_i32_0 = arith.constant 0 : i32
    return %c0_i32 : i32
  }
  func.func @transform_8(%arg0: i32, %arg1: i32) -> (i32, i32, i32) {
    %c0_i32 = arith.constant 0 : i32
    %c0_i32_0 = arith.constant 0 : i32
    %c0_i32_1 = arith.constant 0 : i32
    return %arg0, %c0_i32, %c0_i32_0 : i32, i32, i32
  }
}

</mosaic_0001>

<llo_original>
// kernel: tpu_custom_call.1
$region0: #{tpu_custom_call.1}
  #allocation0 [shape = 'u32[]', space=smem, size = 0x4, offset = 0x4, fixed_abs, tag = 'smem constant byte address 0x4 - core index']
  #allocation1 [shape = 'u32[144,128]{1,0:T(1,128)}', space=vmem, size = 0x12000, scoped, tag = 'internal scratch']
  #allocation2 [shape = 'bf16[256,256]{1,0:T(16,128)(2,1)}', space=vmem, size = 0x20000, scoped, tag = 'scratch operand']
  #allocation3 [shape = 'f32[256,128]{1,0:T(8,128)}', space=vmem, size = 0x20000, scoped, tag = 'scratch operand']
  #allocation4 [shape = 'f32[1]{0:T(128)S(6)}', space=smem, size = 0x200, scoped, tag = 'scoped memory for tpu_custom_call.1']
  %s0 = inlined_call_operand.vmem [shape: f32[2,1,256], index: 0, kind: input, shape index: {}]
  %s1 = inlined_call_operand.hbm [shape: f32[2,256,128], index: 1, kind: input, shape index: {}]
  %s2 = inlined_call_operand.vmem [shape: f32[64,1], index: 2, kind: input, shape index: {}]
  %s3 = inlined_call_operand.vmem [shape: f32[64,1], index: 3, kind: input, shape index: {}]
  %s4 = inlined_call_operand.vmem [shape: bf16[256,64], index: 4, kind: input, shape index: {}]
  %s5 = inlined_call_operand.vmem [shape: bf16[128,256], index: 5, kind: input, shape index: {}]
  %s6 = inlined_call_operand.vmem [shape: bf16[128,128], index: 6, kind: input, shape index: {}]
  %s7 = inlined_call_operand.<no memory space> [shape: f32[1], index: 7, kind: input, shape index: {}]
  %s8 = inlined_call_operand.hbm [shape: f32[2,256,128], index: 8, kind: output, shape index: {}]
  %s9 = sld [smem:[#allocation0]]
  $region77: #{tpu_custom_call.1} parent=0
    _
  %s11 = ssub.s32 1, %s9
  %s12 = scalar_select 0, %s11, %s9
  %13 = sst [smem:[#allocation4]] %s7
  $region1: #{tpu_custom_call.1} parent=0
    #allocation5 [shape = 'u8[262144]{0}', space=vmem, size = 0x40000, scoped, tag = 'input window, operand 1']
    #allocation6 [shape = 's32[2]{0}', space=sflag, size = 0x8, scoped, tag = 'scoped memory for tpu_custom_call.1']
    #allocation7 [shape = 's32[2]{0}', space=sflag, size = 0x8, scoped, tag = 'scoped memory for tpu_custom_call.1']
    #allocation8 [shape = 'u8[262144]{0}', space=vmem, size = 0x40000, scoped, tag = 'output window, operand 0']
    %14 = vsyncpa [#allocation6], 0
    %s15 = scalar_lea.sflag [#allocation6], 1
    %16 = vsyncpa %s15, 0
    %17 = vsyncpa [#allocation7], 0
    %s18 = scalar_lea.sflag [#allocation7], 1
    %19 = vsyncpa %s18, 0
    loop: start=0, step=1, limit=6
    $region2: #{tpu_custom_call.1} parent=1 // loop_pre_header
      _
    $region3: #{tpu_custom_call.1} parent=1 // loop_header
      %s21 = sphi 0, %s25
      %p22 = scmp.ge.s32.totalorder %s21, 6
      %s28 = sphi 0, %s40
      %s29 = sphi 0, %s36
      %s30 = sphi 0, %s28
      %s31 = sphi 0, %s29
      %s32 = sphi 0, %s30
      %s33 = sphi 0, %s31
      %s45 = sphi 0, %s47
      %s48 = sphi 0, %s45
      %s49 = sphi 0, %s48
      %s65 = sphi 0, %s49
      %s71 = sphi 0, %s73
      %s74 = sphi 0, %s71
      %s75 = sphi 0, %s74
      %s91 = sphi 0, %s75
      %s95 = sphi 0, %s95
      %s97 = sphi 0, %s95
      %s98 = sphi 0, %s97
      %s112 = sphi 0, %s98
      %s116 = sphi 0, %s116
      %s118 = sphi 0, %s116
      %s119 = sphi 0, %s118
      %s133 = sphi 0, %s119
      %s137 = sphi 0, %s137
      %s139 = sphi 0, %s137
      %s140 = sphi 0, %s139
      %s154 = sphi 0, %s140
      %s158 = sphi 0, %s158
      %s160 = sphi 0, %s158
      %s161 = sphi 0, %s160
      %s175 = sphi 0, %s161
      %s179 = sphi 0, %s179
      %s181 = sphi 0, %s179
      %s182 = sphi 0, %s181
      %s196 = sphi 0, %s182
      %s200 = sphi 0, %s200
      %s202 = sphi 0, %s200
      %s203 = sphi 0, %s202
      %s217 = sphi 0, %s203
      %s223 = sphi 0, %s225
      %s226 = sphi 0, %s223
      %s227 = sphi 0, %s226
      %s243 = sphi 0, %s227
    $region4: #{tpu_custom_call.1} parent=1 // loop_header_branch
      %24 = sbr.rel (%p22) target = $region8
    $region5: #{tpu_custom_call.1} parent=1 // loop_body
      %s26 = ssub.s32 %s21, 1
      %s27 = ssub.s32 %s21, 2
      %s34 = sadd.s32 1, %s29
      %p35 = scmp.ge.s32.totalorder %s34, 2
      %s36 = scalar_select %p35, 0, %s34
      %s37 = sadd.s32 1, %s28
      %s38 = scalar_select %p35, %s37, %s28
      %p39 = scmp.ge.s32.totalorder %s38, 2
      %s40 = scalar_select %p39, 0, %s38
      %s41 = ssub.s32 %s28, %s40
      %s42 = ssub.s32 %s29, %s36
      %s43 = sor.u32 %s41, %s42
      %p44 = scmp.eq.s32.totalorder %s43, 0
      %s46 = sadd.s32 %s45, 1
      %s47 = scalar_select %p44, %s45, %s46
      %p50 = pneg %p44
      %p51 = scmp.eq.s32.totalorder %s21, 3
      %p52 = por %p50, %p51
      %p53 = scmp.ne.s32.totalorder %s45, %s48
      %p54 = scmp.eq.s32.totalorder %s21, 0
      %p55 = por %p53, %p54
      %p56 = scmp.ne.s32.totalorder %s45, %s48
      %p57 = scmp.eq.s32.totalorder %s26, 3
      %p58 = por %p56, %p57
      %p59 = scmp.ne.s32.totalorder %s48, %s49
      %p60 = scmp.eq.s32.totalorder %s26, 0
      %p61 = por %p59, %p60
      %p62 = scmp.ne.s32.totalorder %s48, %s49
      %p63 = scmp.eq.s32.totalorder %s27, 3
      %p64 = por %p62, %p63
      %p66 = scmp.ne.s32.totalorder %s49, %s65
      %p67 = scmp.eq.s32.totalorder %s27, 0
      %p68 = por %p66, %p67
      %s69 = ssub.s32 %s28, %s40
      %p70 = scmp.eq.s32.totalorder %s69, 0
      %s72 = sadd.s32 %s71, 1
      %s73 = scalar_select %p70, %s71, %s72
      %p76 = pneg %p70
      %p77 = scmp.eq.s32.totalorder %s21, 3
      %p78 = por %p76, %p77
      %p79 = scmp.ne.s32.totalorder %s71, %s74
      %p80 = scmp.eq.s32.totalorder %s21, 0
      %p81 = por %p79, %p80
      %p82 = scmp.ne.s32.totalorder %s71, %s74
      %p83 = scmp.eq.s32.totalorder %s26, 3
      %p84 = por %p82, %p83
      %p85 = scmp.ne.s32.totalorder %s74, %s75
      %p86 = scmp.eq.s32.totalorder %s26, 0
      %p87 = por %p85, %p86
      %p88 = scmp.ne.s32.totalorder %s74, %s75
      %p89 = scmp.eq.s32.totalorder %s27, 3
      %p90 = por %p88, %p89
      %p92 = scmp.ne.s32.totalorder %s75, %s91
      %p93 = scmp.eq.s32.totalorder %s27, 0
      %p94 = por %p92, %p93
      %s96 = sadd.s32 %s95, 1
      %p99 = scmp.eq.s32.totalorder %s21, 3
      %p100 = scmp.ne.s32.totalorder %s95, %s97
      %p101 = scmp.eq.s32.totalorder %s21, 0
      %p102 = por %p100, %p101
      %p103 = scmp.ne.s32.totalorder %s95, %s97
      %p104 = scmp.eq.s32.totalorder %s26, 3
      %p105 = por %p103, %p104
      %p106 = scmp.ne.s32.totalorder %s97, %s98
      %p107 = scmp.eq.s32.totalorder %s26, 0
      %p108 = por %p106, %p107
      %p109 = scmp.ne.s32.totalorder %s97, %s98
      %p110 = scmp.eq.s32.totalorder %s27, 3
      %p111 = por %p109, %p110
      %p113 = scmp.ne.s32.totalorder %s98, %s112
      %p114 = scmp.eq.s32.totalorder %s27, 0
      %p115 = por %p113, %p114
      %s117 = sadd.s32 %s116, 1
      %p120 = scmp.eq.s32.totalorder %s21, 3
      %p121 = scmp.ne.s32.totalorder %s116, %s118
      %p122 = scmp.eq.s32.totalorder %s21, 0
      %p123 = por %p121, %p122
      %p124 = scmp.ne.s32.totalorder %s116, %s118
      %p125 = scmp.eq.s32.totalorder %s26, 3
      %p126 = por %p124, %p125
      %p127 = scmp.ne.s32.totalorder %s118, %s119
      %p128 = scmp.eq.s32.totalorder %s26, 0
      %p129 = por %p127, %p128
      %p130 = scmp.ne.s32.totalorder %s118, %s119
      %p131 = scmp.eq.s32.totalorder %s27, 3
      %p132 = por %p130, %p131
      %p134 = scmp.ne.s32.totalorder %s119, %s133
      %p135 = scmp.eq.s32.totalorder %s27, 0
      %p136 = por %p134, %p135
      %s138 = sadd.s32 %s137, 1
      %p141 = scmp.eq.s32.totalorder %s21, 3
      %p142 = scmp.ne.s32.totalorder %s137, %s139
      %p143 = scmp.eq.s32.totalorder %s21, 0
      %p144 = por %p142, %p143
      %p145 = scmp.ne.s32.totalorder %s137, %s139
      %p146 = scmp.eq.s32.totalorder %s26, 3
      %p147 = por %p145, %p146
      %p148 = scmp.ne.s32.totalorder %s139, %s140
      %p149 = scmp.eq.s32.totalorder %s26, 0
      %p150 = por %p148, %p149
      %p151 = scmp.ne.s32.totalorder %s139, %s140
      %p152 = scmp.eq.s32.totalorder %s27, 3
      %p153 = por %p151, %p152
      %p155 = scmp.ne.s32.totalorder %s140, %s154
      %p156 = scmp.eq.s32.totalorder %s27, 0
      %p157 = por %p155, %p156
      %s159 = sadd.s32 %s158, 1
      %p162 = scmp.eq.s32.totalorder %s21, 3
      %p163 = scmp.ne.s32.totalorder %s158, %s160
      %p164 = scmp.eq.s32.totalorder %s21, 0
      %p165 = por %p163, %p164
      %p166 = scmp.ne.s32.totalorder %s158, %s160
      %p167 = scmp.eq.s32.totalorder %s26, 3
      %p168 = por %p166, %p167
      %p169 = scmp.ne.s32.totalorder %s160, %s161
      %p170 = scmp.eq.s32.totalorder %s26, 0
      %p171 = por %p169, %p170
      %p172 = scmp.ne.s32.totalorder %s160, %s161
      %p173 = scmp.eq.s32.totalorder %s27, 3
      %p174 = por %p172, %p173
      %p176 = scmp.ne.s32.totalorder %s161, %s175
      %p177 = scmp.eq.s32.totalorder %s27, 0
      %p178 = por %p176, %p177
      %s180 = sadd.s32 %s179, 1
      %p183 = scmp.eq.s32.totalorder %s21, 3
      %p184 = scmp.ne.s32.totalorder %s179, %s181
      %p185 = scmp.eq.s32.totalorder %s21, 0
      %p186 = por %p184, %p185
      %p187 = scmp.ne.s32.totalorder %s179, %s181
      %p188 = scmp.eq.s32.totalorder %s26, 3
      %p189 = por %p187, %p188
      %p190 = scmp.ne.s32.totalorder %s181, %s182
      %p191 = scmp.eq.s32.totalorder %s26, 0
      %p192 = por %p190, %p191
      %p193 = scmp.ne.s32.totalorder %s181, %s182
      %p194 = scmp.eq.s32.totalorder %s27, 3
      %p195 = por %p193, %p194
      %p197 = scmp.ne.s32.totalorder %s182, %s196
      %p198 = scmp.eq.s32.totalorder %s27, 0
      %p199 = por %p197, %p198
      %s201 = sadd.s32 %s200, 1
      %p204 = scmp.eq.s32.totalorder %s21, 3
      %p205 = scmp.ne.s32.totalorder %s200, %s202
      %p206 = scmp.eq.s32.totalorder %s21, 0
      %p207 = por %p205, %p206
      %p208 = scmp.ne.s32.totalorder %s200, %s202
      %p209 = scmp.eq.s32.totalorder %s26, 3
      %p210 = por %p208, %p209
      %p211 = scmp.ne.s32.totalorder %s202, %s203
      %p212 = scmp.eq.s32.totalorder %s26, 0
      %p213 = por %p211, %p212
      %p214 = scmp.ne.s32.totalorder %s202, %s203
      %p215 = scmp.eq.s32.totalorder %s27, 3
      %p216 = por %p214, %p215
      %p218 = scmp.ne.s32.totalorder %s203, %s217
      %p219 = scmp.eq.s32.totalorder %s27, 0
      %p220 = por %p218, %p219
      %s221 = ssub.s32 %s28, %s40
      %p222 = scmp.eq.s32.totalorder %s221, 0
      %s224 = sadd.s32 %s223, 1
      %s225 = scalar_select %p222, %s223, %s224
      %p228 = pneg %p222
      %p229 = scmp.eq.s32.totalorder %s21, 3
      %p230 = por %p228, %p229
      %p231 = scmp.ne.s32.totalorder %s223, %s226
      %p232 = scmp.eq.s32.totalorder %s21, 0
      %p233 = por %p231, %p232
      %p234 = scmp.ne.s32.totalorder %s223, %s226
      %p235 = scmp.eq.s32.totalorder %s26, 3
      %p236 = por %p234, %p235
      %p237 = scmp.ne.s32.totalorder %s226, %s227
      %p238 = scmp.eq.s32.totalorder %s26, 0
      %p239 = por %p237, %p238
      %p240 = scmp.ne.s32.totalorder %s226, %s227
      %p241 = scmp.eq.s32.totalorder %s27, 3
      %p242 = por %p240, %p241
      %p244 = scmp.ne.s32.totalorder %s227, %s243
      %p245 = scmp.eq.s32.totalorder %s27, 0
      %p246 = por %p244, %p245
      %p247 = scmp.le.s32.totalorder 1, %s21
      %p248 = scmp.lt.s32.totalorder %s21, 5
      %p249 = pnand %p247, %p248
      %p250 = pneg %p249
      // Predicated region
      $region9: #{tpu_custom_call.1} parent=5 // pred_check
        _
      $region10: #{tpu_custom_call.1} parent=5 // pred_check_branch
        %252 = sbr.rel (%p249) target = $region12
      $region11: #{tpu_custom_call.1} parent=5 // pred_region
        %s253 = ssub.s32 %s21, 1
        // Predicated region
        $region13: #{tpu_custom_call.1} parent=11 // pred_check
          %p254 = pneg %p108
        $region14: #{tpu_custom_call.1} parent=11 // pred_check_branch
          %256 = sbr.rel (%p254) target = $region16
        $region15: #{tpu_custom_call.1} parent=11 // pred_region
          _
        $region16: #{tpu_custom_call.1} parent=11 // pred_fallthru
          _
        // Predicated region
        $region17: #{tpu_custom_call.1} parent=11 // pred_check
          %p257 = pneg %p129
        $region18: #{tpu_custom_call.1} parent=11 // pred_check_branch
          %259 = sbr.rel (%p257) target = $region20
        $region19: #{tpu_custom_call.1} parent=11 // pred_region
          _
        $region20: #{tpu_custom_call.1} parent=11 // pred_fallthru
          _
        // Predicated region
        $region21: #{tpu_custom_call.1} parent=11 // pred_check
          %p260 = pneg %p150
        $region22: #{tpu_custom_call.1} parent=11 // pred_check_branch
          %262 = sbr.rel (%p260) target = $region24
        $region23: #{tpu_custom_call.1} parent=11 // pred_region
          _
        $region24: #{tpu_custom_call.1} parent=11 // pred_fallthru
          _
        // Predicated region
        $region25: #{tpu_custom_call.1} parent=11 // pred_check
          %p263 = pneg %p171
        $region26: #{tpu_custom_call.1} parent=11 // pred_check_branch
          %265 = sbr.rel (%p263) target = $region28
        $region27: #{tpu_custom_call.1} parent=11 // pred_region
          _
        $region28: #{tpu_custom_call.1} parent=11 // pred_fallthru
          _
        // Predicated region
        $region29: #{tpu_custom_call.1} parent=11 // pred_check
          %p266 = pneg %p192
        $region30: #{tpu_custom_call.1} parent=11 // pred_check_branch
          %268 = sbr.rel (%p266) target = $region32
        $region31: #{tpu_custom_call.1} parent=11 // pred_region
          _
        $region32: #{tpu_custom_call.1} parent=11 // pred_fallthru
          _
        // Predicated region
        $region33: #{tpu_custom_call.1} parent=11 // pred_check
          %p269 = pneg %p213
        $region34: #{tpu_custom_call.1} parent=11 // pred_check_branch
          %271 = sbr.rel (%p269) target = $region36
        $region35: #{tpu_custom_call.1} parent=11 // pred_region
          _
        $region36: #{tpu_custom_call.1} parent=11 // pred_fallthru
          _
      $region12: #{tpu_custom_call.1} parent=5 // pred_fallthru
        _
      %p272 = scmp.lt.s32.totalorder %s21, 4
      // Predicated region
      $region37: #{tpu_custom_call.1} parent=5 // pred_check
        %p273 = pneg %p272
      $region38: #{tpu_custom_call.1} parent=5 // pred_check_branch
        %275 = sbr.rel (%p273) target = $region40
      $region39: #{tpu_custom_call.1} parent=5 // pred_region
        // Predicated region
        $region41: #{tpu_custom_call.1} parent=39 // pred_check
          %p276 = pneg %p55
        $region42: #{tpu_custom_call.1} parent=39 // pred_check_branch
          %278 = sbr.rel (%p276) target = $region44
        $region43: #{tpu_custom_call.1} parent=39 // pred_region
          %p279 = scmp.lt.s32.totalorder %s28, 1
          %s280 = scalar_select %p279, %s28, 1
          %p281 = scmp.lt.s32.totalorder %s29, 1
          %s282 = scalar_select %p281, %s29, 1
          %s283 = smul.addr %s280, 2
          %s284 = sadd.s32 %s282, %s283
          %s285 = scalar_lea.vmem %s0, %s284
        $region44: #{tpu_custom_call.1} parent=39 // pred_fallthru
          _
        // Predicated region
        $region45: #{tpu_custom_call.1} parent=39 // pred_check
          %p286 = pneg %p81
        $region46: #{tpu_custom_call.1} parent=39 // pred_check_branch
          %288 = sbr.rel (%p286) target = $region48
        $region47: #{tpu_custom_call.1} parent=39 // pred_region
          %s289 = sand.u32 %s71, 1
          %s290 = scalar_lea.sflag [#allocation6], %s289
          %s291 = sand.u32 %s71, 1
          %s292 = smul.addr %s291, 256
          %s293 = scalar_lea.vmem [#allocation5], %s292
          %s295 = ssub.s32 4096, 4096
          %296 = vsyncadd %s290, %s295
          %s297 = smul.addr %s28, 32
          %s298 = smul.addr %s297, 128
          %s299 = scalar_lea.hbm %s1, %s298
          %s300 = sshll.u32 %s293, 4
          %s301 = int_to_ptr.vmem [resolvable:$true] %s300
          %306 = dma.hbm_to_vmem [thread:$0]  %s299, 4096, %s301, %s290, 128, 128, 8
        $region48: #{tpu_custom_call.1} parent=39 // pred_fallthru
          _
      $region40: #{tpu_custom_call.1} parent=5 // pred_fallthru
        _
      %p307 = scmp.le.s32.totalorder 1, %s21
      %p308 = scmp.lt.s32.totalorder %s21, 5
      %p309 = pnand %p307, %p308
      %p310 = pneg %p309
      // Predicated region
      $region49: #{tpu_custom_call.1} parent=5 // pred_check
        _
      $region50: #{tpu_custom_call.1} parent=5 // pred_check_branch
        %312 = sbr.rel (%p309) target = $region52
      $region51: #{tpu_custom_call.1} parent=5 // pred_region
        %s313 = ssub.s32 %s21, 1
        %s314 = sand.u32 %s74, 1
        %s315 = scalar_lea.sflag [#allocation6], %s314
        %s316 = sand.u32 %s74, 1
        %s317 = smul.addr %s316, 256
        %s318 = scalar_lea.vmem [#allocation5], %s317
        // Predicated region
        $region53: #{tpu_custom_call.1} parent=51 // pred_check
          %p319 = pneg %p87
        $region54: #{tpu_custom_call.1} parent=51 // pred_check_branch
          %321 = sbr.rel (%p319) target = $region56
        $region55: #{tpu_custom_call.1} parent=51 // pred_region
          %322 = dma.done %s315, 4096
        $region56: #{tpu_custom_call.1} parent=51 // pred_fallthru
          _
        %p323 = scmp.lt.s32.totalorder %s30, 1
        %s324 = scalar_select %p323, %s30, 1
        %p325 = scmp.lt.s32.totalorder %s31, 1
        %s326 = scalar_select %p325, %s31, 1
        %s327 = smul.addr %s324, 2
        %s328 = sadd.s32 %s326, %s327
        %s329 = scalar_lea.vmem %s0, %s328
        %p330 = pneg %p61
        %p331 = pneg %p58
        %s332 = sand.u32 %s74, 1
        %s333 = scalar_lea.sflag [#allocation6], %s332
        %s334 = sand.u32 %s74, 1
        %s335 = smul.addr %s334, 256
        %s336 = scalar_lea.vmem [#allocation5], %s335
        %p337 = pneg %p87
        %p338 = pneg %p84
        %p339 = pneg %p108
        %p340 = pneg %p105
        %p341 = pneg %p129
        %p342 = pneg %p126
        %p343 = pneg %p150
        %p344 = pneg %p147
        %p345 = pneg %p171
        %p346 = pneg %p168
        %p347 = pneg %p192
        %p348 = pneg %p189
        %p349 = pneg %p213
        %p350 = pneg %p210
        %p351 = pneg %p239
        %p352 = pneg %p236
        %s353 = sand.u32 %s226, 1
        %s354 = scalar_lea.sflag [#allocation7], %s353
        %s355 = sand.u32 %s226, 1
        %s356 = smul.addr %s355, 256
        %s357 = scalar_lea.vmem [#allocation8], %s356
        %p358 = scmp.lt.s32.totalorder %s30, 1
        %s359 = scalar_select %p358, %s30, 1
        %p360 = scmp.lt.s32.totalorder %s31, 1
        %s361 = scalar_select %p360, %s31, 1
        %s362 = smul.addr %s359, 2
        %s363 = sadd.s32 %s361, %s362
        %s364 = scalar_lea.vmem %s0, %s363
        %p366 = scmp.eq.s32.totalorder %s31, 0
        // Predicated region
        $region57: #{tpu_custom_call.1} parent=51 // pred_check
          %p367 = pneg %p366
        $region58: #{tpu_custom_call.1} parent=51 // pred_check_branch
          %369 = sbr.rel (%p367) target = $region60
        $region59: #{tpu_custom_call.1} parent=51 // pred_region
          %v370 = vld [vmem:[%s318] sm:$0xff]
          %v371 = vld [vmem:[%s318 + $0x8] sm:$0xff]
          %v372 = vld [vmem:[%s318 + $0x10] sm:$0xff]
          %v373 = vld [vmem:[%s318 + $0x18] sm:$0xff]
          %v374 = vld [vmem:[%s318 + $0x20] sm:$0xff]
          %v375 = vld [vmem:[%s318 + $0x28] sm:$0xff]
          %v376 = vld [vmem:[%s318 + $0x30] sm:$0xff]
          %v377 = vld [vmem:[%s318 + $0x38] sm:$0xff]
          %v378 = vld [vmem:[%s318 + $0x40] sm:$0xff]
          %v379 = vld [vmem:[%s318 + $0x48] sm:$0xff]
          %v380 = vld [vmem:[%s318 + $0x50] sm:$0xff]
          %v381 = vld [vmem:[%s318 + $0x58] sm:$0xff]
          %v382 = vld [vmem:[%s318 + $0x60] sm:$0xff]
          %v383 = vld [vmem:[%s318 + $0x68] sm:$0xff]
          %v384 = vld [vmem:[%s318 + $0x70] sm:$0xff]
          %v385 = vld [vmem:[%s318 + $0x78] sm:$0xff]
          %v386 = vld [vmem:[%s318 + $0x80] sm:$0xff]
          %v387 = vld [vmem:[%s318 + $0x88] sm:$0xff]
          %v388 = vld [vmem:[%s318 + $0x90] sm:$0xff]
          %v389 = vld [vmem:[%s318 + $0x98] sm:$0xff]
          %v390 = vld [vmem:[%s318 + $0xa0] sm:$0xff]
          %v391 = vld [vmem:[%s318 + $0xa8] sm:$0xff]
          %v392 = vld [vmem:[%s318 + $0xb0] sm:$0xff]
          %v393 = vld [vmem:[%s318 + $0xb8] sm:$0xff]
          %v394 = vld [vmem:[%s318 + $0xc0] sm:$0xff]
          %v395 = vld [vmem:[%s318 + $0xc8] sm:$0xff]
          %v396 = vld [vmem:[%s318 + $0xd0] sm:$0xff]
          %v397 = vld [vmem:[%s318 + $0xd8] sm:$0xff]
          %v398 = vld [vmem:[%s318 + $0xe0] sm:$0xff]
          %v399 = vld [vmem:[%s318 + $0xe8] sm:$0xff]
          %v400 = vld [vmem:[%s318 + $0xf0] sm:$0xff]
          %v401 = vld [vmem:[%s318 + $0xf8] sm:$0xff]
          %v402 = vpack.c.bf16 %v371, %v370
          %v403 = vpack.c.bf16 %v373, %v372
          %v404 = vpack.c.bf16 %v375, %v374
          %v405 = vpack.c.bf16 %v377, %v376
          %v406 = vpack.c.bf16 %v379, %v378
          %v407 = vpack.c.bf16 %v381, %v380
          %v408 = vpack.c.bf16 %v383, %v382
          %v409 = vpack.c.bf16 %v385, %v384
          %v410 = vpack.c.bf16 %v387, %v386
          %v411 = vpack.c.bf16 %v389, %v388
          %v412 = vpack.c.bf16 %v391, %v390
          %v413 = vpack.c.bf16 %v393, %v392
          %v414 = vpack.c.bf16 %v395, %v394
          %v415 = vpack.c.bf16 %v397, %v396
          %v416 = vpack.c.bf16 %v399, %v398
          %v417 = vpack.c.bf16 %v401, %v400
          %v418 = vld [vmem:[%s5] sm:$0xff]
          %v419 = vld [vmem:[%s5 + $0x8] sm:$0xff]
          %v420 = vld [vmem:[%s5 + $0x10] sm:$0xff]
          %v421 = vld [vmem:[%s5 + $0x18] sm:$0xff]
          %v422 = vld [vmem:[%s5 + $0x20] sm:$0xff]
          %v423 = vld [vmem:[%s5 + $0x28] sm:$0xff]
          %v424 = vld [vmem:[%s5 + $0x30] sm:$0xff]
          %v425 = vld [vmem:[%s5 + $0x38] sm:$0xff]
          %v426 = vld [vmem:[%s5 + $0x40] sm:$0xff]
          %v427 = vld [vmem:[%s5 + $0x48] sm:$0xff]
          %v428 = vld [vmem:[%s5 + $0x50] sm:$0xff]
          %v429 = vld [vmem:[%s5 + $0x58] sm:$0xff]
          %v430 = vld [vmem:[%s5 + $0x60] sm:$0xff]
          %v431 = vld [vmem:[%s5 + $0x68] sm:$0xff]
          %v432 = vld [vmem:[%s5 + $0x70] sm:$0xff]
          %v433 = vld [vmem:[%s5 + $0x78] sm:$0xff]
          %v450 = vunpack.c.l.b16 %v418
          %v451 = vunpack.c.h.b16 %v418
          %v452 = vunpack.c.l.b16 %v419
          %v453 = vunpack.c.h.b16 %v419
          %v454 = vunpack.c.l.b16 %v420
          %v455 = vunpack.c.h.b16 %v420
          %v456 = vunpack.c.l.b16 %v421
          %v457 = vunpack.c.h.b16 %v421
          %v458 = vunpack.c.l.b16 %v422
          %v459 = vunpack.c.h.b16 %v422
          %v460 = vunpack.c.l.b16 %v423
          %v461 = vunpack.c.h.b16 %v423
          %v462 = vunpack.c.l.b16 %v424
          %v463 = vunpack.c.h.b16 %v424
          %v464 = vunpack.c.l.b16 %v425
          %v465 = vunpack.c.h.b16 %v425
          %v466 = vunpack.c.l.b16 %v426
          %v467 = vunpack.c.h.b16 %v426
          %v468 = vunpack.c.l.b16 %v427
          %v469 = vunpack.c.h.b16 %v427
          %v470 = vunpack.c.l.b16 %v428
          %v471 = vunpack.c.h.b16 %v428
          %v472 = vunpack.c.l.b16 %v429
          %v473 = vunpack.c.h.b16 %v429
          %v474 = vunpack.c.l.b16 %v430
          %v475 = vunpack.c.h.b16 %v430
          %v476 = vunpack.c.l.b16 %v431
          %v477 = vunpack.c.h.b16 %v431
          %v478 = vunpack.c.l.b16 %v432
          %v479 = vunpack.c.h.b16 %v432
          %v480 = vunpack.c.l.b16 %v433
          %v481 = vunpack.c.h.b16 %v433
          %v482 = vpack.c.b16 %v452, %v450
          %v483 = vpack.c.b16 %v453, %v451
          %v484 = vpack.c.b16 %v456, %v454
          %v485 = vpack.c.b16 %v457, %v455
          %v486 = vpack.c.b16 %v460, %v458
          %v487 = vpack.c.b16 %v461, %v459
          %v488 = vpack.c.b16 %v464, %v462
          %v489 = vpack.c.b16 %v465, %v463
          %v490 = vpack.c.b16 %v468, %v466
          %v491 = vpack.c.b16 %v469, %v467
          %v492 = vpack.c.b16 %v472, %v470
          %v493 = vpack.c.b16 %v473, %v471
          %v494 = vpack.c.b16 %v476, %v474
          %v495 = vpack.c.b16 %v477, %v475
          %v496 = vpack.c.b16 %v480, %v478
          %v497 = vpack.c.b16 %v481, %v479
          %514 = vmatprep.subr.bf16.mxu0 %v483
          %515 = vmatpush1.bf16.msra.mxu0 %v482
          %516 = vmatprep.subr.bf16.mxu0 %v485
          %517 = vmatpush1.bf16.msra.mxu0 %v484
          %518 = vmatprep.subr.bf16.mxu0 %v487
          %519 = vmatpush1.bf16.msra.mxu0 %v486
          %520 = vmatprep.subr.bf16.mxu0 %v489
          %521 = vmatpush1.bf16.msra.mxu0 %v488
          %522 = vmatprep.subr.bf16.mxu0 %v491
          %523 = vmatpush1.bf16.msra.mxu0 %v490
          %524 = vmatprep.subr.bf16.mxu0 %v493
          %525 = vmatpush1.bf16.msra.mxu0 %v492
          %526 = vmatprep.subr.bf16.mxu0 %v495
          %527 = vmatpush1.bf16.msra.mxu0 %v494
          %528 = vmatprep.subr.bf16.mxu0 %v497
          %529 = vmatpush1.bf16.msra.mxu0 %v496
          %530 = vmatprep.subr.bf16.mxu0 0
          %531 = vmatpush1.bf16.msra.mxu0 0
          %532 = vmatprep.subr.bf16.mxu0 0
          %533 = vmatpush1.bf16.msra.mxu0 0
          %534 = vmatprep.subr.bf16.mxu0 0
          %535 = vmatpush1.bf16.msra.mxu0 0
          %536 = vmatprep.subr.bf16.mxu0 0
          %537 = vmatpush1.bf16.msra.mxu0 0
          %538 = vmatprep.subr.bf16.mxu0 0
          %539 = vmatpush1.bf16.msra.mxu0 0
          %540 = vmatprep.subr.bf16.mxu0 0
          %541 = vmatpush1.bf16.msra.mxu0 0
          %542 = vmatprep.subr.bf16.mxu0 0
          %543 = vmatpush1.bf16.msra.mxu0 0
          %544 = vmatprep.subr.bf16.mxu0 0
          %545 = vmatpush1.bf16.msra.mxu0 0
          %546 = vmatprep.mubr.bf16.mxu0 0
          %547 = vmatmul.mubr.bf16.gmra.mrb[0].mxu0 %v402
          %v548 = vpop.f32.mrb[0].mxu0
          %v549 = vadd.f32 0.0, %v548
          %v550 = vpop.f32.mrb[0].mxu0
          %v551 = vadd.f32 0.0, %v550
          %v552 = vpop.f32.mrb[0].mxu0
          %v553 = vadd.f32 0.0, %v552
          %v554 = vpop.f32.mrb[0].mxu0
          %v555 = vadd.f32 0.0, %v554
          %556 = vmatprep.mubr.bf16.mxu0 0
          %557 = vmatmul.mubr.bf16.gmra.mrb[0].mxu0 %v403
          %v558 = vpop.f32.mrb[0].mxu0
          %v559 = vadd.f32 0.0, %v558
          %v560 = vpop.f32.mrb[0].mxu0
          %v561 = vadd.f32 0.0, %v560
          %v562 = vpop.f32.mrb[0].mxu0
          %v563 = vadd.f32 0.0, %v562
          %v564 = vpop.f32.mrb[0].mxu0
          %v565 = vadd.f32 0.0, %v564
          %566 = vmatprep.mubr.bf16.mxu0 0
          %567 = vmatmul.mubr.bf16.gmra.mrb[0].mxu0 %v404
          %v568 = vpop.f32.mrb[0].mxu0
          %v569 = vadd.f32 0.0, %v568
          %v570 = vpop.f32.mrb[0].mxu0
          %v571 = vadd.f32 0.0, %v570
          %v572 = vpop.f32.mrb[0].mxu0
          %v573 = vadd.f32 0.0, %v572
          %v574 = vpop.f32.mrb[0].mxu0
          %v575 = vadd.f32 0.0, %v574
          %576 = vmatprep.mubr.bf16.mxu0 0
          %577 = vmatmul.mubr.bf16.gmra.mrb[0].mxu0 %v405
          %v578 = vpop.f32.mrb[0].mxu0
          %v579 = vadd.f32 0.0, %v578
          %v580 = vpop.f32.mrb[0].mxu0
          %v581 = vadd.f32 0.0, %v580
          %v582 = vpop.f32.mrb[0].mxu0
          %v583 = vadd.f32 0.0, %v582
          %v584 = vpop.f32.mrb[0].mxu0
          %v585 = vadd.f32 0.0, %v584
          %586 = vmatprep.mubr.bf16.mxu0 0
          %587 = vmatmul.mubr.bf16.gmra.mrb[0].mxu0 %v406
          %v588 = vpop.f32.mrb[0].mxu0
          %v589 = vadd.f32 0.0, %v588
          %v590 = vpop.f32.mrb[0].mxu0
          %v591 = vadd.f32 0.0, %v590
          %v592 = vpop.f32.mrb[0].mxu0
          %v593 = vadd.f32 0.0, %v592
          %v594 = vpop.f32.mrb[0].mxu0
          %v595 = vadd.f32 0.0, %v594
          %596 = vmatprep.mubr.bf16.mxu0 0
          %597 = vmatmul.mubr.bf16.gmra.mrb[0].mxu0 %v407
          %v598 = vpop.f32.mrb[0].mxu0
          %v599 = vadd.f32 0.0, %v598
          %v600 = vpop.f32.mrb[0].mxu0
          %v601 = vadd.f32 0.0, %v600
          %v602 = vpop.f32.mrb[0].mxu0
          %v603 = vadd.f32 0.0, %v602
          %v604 = vpop.f32.mrb[0].mxu0
          %v605 = vadd.f32 0.0, %v604
          %606 = vmatprep.mubr.bf16.mxu0 0
          %607 = vmatmul.mubr.bf16.gmra.mrb[0].mxu0 %v408
          %v608 = vpop.f32.mrb[0].mxu0
          %v609 = vadd.f32 0.0, %v608
          %v610 = vpop.f32.mrb[0].mxu0
          %v611 = vadd.f32 0.0, %v610
          %v612 = vpop.f32.mrb[0].mxu0
          %v613 = vadd.f32 0.0, %v612
          %v614 = vpop.f32.mrb[0].mxu0
          %v615 = vadd.f32 0.0, %v614
          %616 = vmatprep.mubr.bf16.mxu0 0
          %617 = vmatmul.mubr.bf16.gmra.mrb[0].mxu0 %v409
          %v618 = vpop.f32.mrb[0].mxu0
          %v619 = vadd.f32 0.0, %v618
          %v620 = vpop.f32.mrb[0].mxu0
          %v621 = vadd.f32 0.0, %v620
          %v622 = vpop.f32.mrb[0].mxu0
          %v623 = vadd.f32 0.0, %v622
          %v624 = vpop.f32.mrb[0].mxu0
          %v625 = vadd.f32 0.0, %v624
          %626 = vmatprep.mubr.bf16.mxu0 0
          %627 = vmatmul.mubr.bf16.gmra.mrb[0].mxu0 %v410
          %v628 = vpop.f32.mrb[0].mxu0
          %v629 = vadd.f32 0.0, %v628
          %v630 = vpop.f32.mrb[0].mxu0
          %v631 = vadd.f32 0.0, %v630
          %v632 = vpop.f32.mrb[0].mxu0
          %v633 = vadd.f32 0.0, %v632
          %v634 = vpop.f32.mrb[0].mxu0
          %v635 = vadd.f32 0.0, %v634
          %636 = vmatprep.mubr.bf16.mxu0 0
          %637 = vmatmul.mubr.bf16.gmra.mrb[0].mxu0 %v411
          %v638 = vpop.f32.mrb[0].mxu0
          %v639 = vadd.f32 0.0, %v638
          %v640 = vpop.f32.mrb[0].mxu0
          %v641 = vadd.f32 0.0, %v640
          %v642 = vpop.f32.mrb[0].mxu0
          %v643 = vadd.f32 0.0, %v642
          %v644 = vpop.f32.mrb[0].mxu0
          %v645 = vadd.f32 0.0, %v644
          %646 = vmatprep.mubr.bf16.mxu0 0
          %647 = vmatmul.mubr.bf16.gmra.mrb[0].mxu0 %v412
          %v648 = vpop.f32.mrb[0].mxu0
          %v649 = vadd.f32 0.0, %v648
          %v650 = vpop.f32.mrb[0].mxu0
          %v651 = vadd.f32 0.0, %v650
          %v652 = vpop.f32.mrb[0].mxu0
          %v653 = vadd.f32 0.0, %v652
          %v654 = vpop.f32.mrb[0].mxu0
          %v655 = vadd.f32 0.0, %v654
          %656 = vmatprep.mubr.bf16.mxu0 0
          %657 = vmatmul.mubr.bf16.gmra.mrb[0].mxu0 %v413
          %v658 = vpop.f32.mrb[0].mxu0
          %v659 = vadd.f32 0.0, %v658
          %v660 = vpop.f32.mrb[0].mxu0
          %v661 = vadd.f32 0.0, %v660
          %v662 = vpop.f32.mrb[0].mxu0
          %v663 = vadd.f32 0.0, %v662
          %v664 = vpop.f32.mrb[0].mxu0
          %v665 = vadd.f32 0.0, %v664
          %666 = vmatprep.mubr.bf16.mxu0 0
          %667 = vmatmul.mubr.bf16.gmra.mrb[0].mxu0 %v414
          %v668 = vpop.f32.mrb[0].mxu0
          %v669 = vadd.f32 0.0, %v668
          %v670 = vpop.f32.mrb[0].mxu0
          %v671 = vadd.f32 0.0, %v670
          %v672 = vpop.f32.mrb[0].mxu0
          %v673 = vadd.f32 0.0, %v672
          %v674 = vpop.f32.mrb[0].mxu0
          %v675 = vadd.f32 0.0, %v674
          %676 = vmatprep.mubr.bf16.mxu0 0
          %677 = vmatmul.mubr.bf16.gmra.mrb[0].mxu0 %v415
          %v678 = vpop.f32.mrb[0].mxu0
          %v679 = vadd.f32 0.0, %v678
          %v680 = vpop.f32.mrb[0].mxu0
          %v681 = vadd.f32 0.0, %v680
          %v682 = vpop.f32.mrb[0].mxu0
          %v683 = vadd.f32 0.0, %v682
          %v684 = vpop.f32.mrb[0].mxu0
          %v685 = vadd.f32 0.0, %v684
          %686 = vmatprep.mubr.bf16.mxu0 0
          %687 = vmatmul.mubr.bf16.gmra.mrb[0].mxu0 %v416
          %v688 = vpop.f32.mrb[0].mxu0
          %v689 = vadd.f32 0.0, %v688
          %v690 = vpop.f32.mrb[0].mxu0
          %v691 = vadd.f32 0.0, %v690
          %v692 = vpop.f32.mrb[0].mxu0
          %v693 = vadd.f32 0.0, %v692
          %v694 = vpop.f32.mrb[0].mxu0
          %v695 = vadd.f32 0.0, %v694
          %696 = vmatprep.mubr.bf16.mxu0 0
          %697 = vmatmul.mubr.bf16.gmra.mrb[0].mxu0 %v417
          %v698 = vpop.f32.mrb[0].mxu0
          %v699 = vadd.f32 0.0, %v698
          %v700 = vpop.f32.mrb[0].mxu0
          %v701 = vadd.f32 0.0, %v700
          %v702 = vpop.f32.mrb[0].mxu0
          %v703 = vadd.f32 0.0, %v702
          %v704 = vpop.f32.mrb[0].mxu0
          %v705 = vadd.f32 0.0, %v704
          %706 = vdwg.mxu0
          %v707 = vpack.c.bf16 %v553, %v549
          %v708 = vpack.c.bf16 %v555, %v551
          %v709 = vpack.c.bf16 %v563, %v559
          %v710 = vpack.c.bf16 %v565, %v561
          %v711 = vpack.c.bf16 %v573, %v569
          %v712 = vpack.c.bf16 %v575, %v571
          %v713 = vpack.c.bf16 %v583, %v579
          %v714 = vpack.c.bf16 %v585, %v581
          %v715 = vpack.c.bf16 %v593, %v589
          %v716 = vpack.c.bf16 %v595, %v591
          %v717 = vpack.c.bf16 %v603, %v599
          %v718 = vpack.c.bf16 %v605, %v601
          %v719 = vpack.c.bf16 %v613, %v609
          %v720 = vpack.c.bf16 %v615, %v611
          %v721 = vpack.c.bf16 %v623, %v619
          %v722 = vpack.c.bf16 %v625, %v621
          %v723 = vpack.c.bf16 %v633, %v629
          %v724 = vpack.c.bf16 %v635, %v631
          %v725 = vpack.c.bf16 %v643, %v639
          %v726 = vpack.c.bf16 %v645, %v641
          %v727 = vpack.c.bf16 %v653, %v649
          %v728 = vpack.c.bf16 %v655, %v651
          %v729 = vpack.c.bf16 %v663, %v659
          %v730 = vpack.c.bf16 %v665, %v661
          %v731 = vpack.c.bf16 %v673, %v669
          %v732 = vpack.c.bf16 %v675, %v671
          %v733 = vpack.c.bf16 %v683, %v679
          %v734 = vpack.c.bf16 %v685, %v681
          %v735 = vpack.c.bf16 %v693, %v689
          %v736 = vpack.c.bf16 %v695, %v691
          %v737 = vpack.c.bf16 %v703, %v699
          %v738 = vpack.c.bf16 %v705, %v701
          %739 = vst [vmem:[#allocation2] sm:$0xff] %v707
          %740 = vst [vmem:[#allocation2 + $0x8] sm:$0xff] %v708
          %741 = vst [vmem:[#allocation2 + $0x10] sm:$0xff] %v709
          %742 = vst [vmem:[#allocation2 + $0x18] sm:$0xff] %v710
          %743 = vst [vmem:[#allocation2 + $0x20] sm:$0xff] %v711
          %744 = vst [vmem:[#allocation2 + $0x28] sm:$0xff] %v712
          %745 = vst [vmem:[#allocation2 + $0x30] sm:$0xff] %v713
          %746 = vst [vmem:[#allocation2 + $0x38] sm:$0xff] %v714
          %747 = vst [vmem:[#allocation2 + $0x40] sm:$0xff] %v715
          %748 = vst [vmem:[#allocation2 + $0x48] sm:$0xff] %v716
          %749 = vst [vmem:[#allocation2 + $0x50] sm:$0xff] %v717
          %750 = vst [vmem:[#allocation2 + $0x58] sm:$0xff] %v718
          %751 = vst [vmem:[#allocation2 + $0x60] sm:$0xff] %v719
          %752 = vst [vmem:[#allocation2 + $0x68] sm:$0xff] %v720
          %753 = vst [vmem:[#allocation2 + $0x70] sm:$0xff] %v721
          %754 = vst [vmem:[#allocation2 + $0x78] sm:$0xff] %v722
          %755 = vst [vmem:[#allocation2 + $0x80] sm:$0xff] %v723
          %756 = vst [vmem:[#allocation2 + $0x88] sm:$0xff] %v724
          %757 = vst [vmem:[#allocation2 + $0x90] sm:$0xff] %v725
          %758 = vst [vmem:[#allocation2 + $0x98] sm:$0xff] %v726
          %759 = vst [vmem:[#allocation2 + $0xa0] sm:$0xff] %v727
          %760 = vst [vmem:[#allocation2 + $0xa8] sm:$0xff] %v728
          %761 = vst [vmem:[#allocation2 + $0xb0] sm:$0xff] %v729
          %762 = vst [vmem:[#allocation2 + $0xb8] sm:$0xff] %v730
          %763 = vst [vmem:[#allocation2 + $0xc0] sm:$0xff] %v731
          %764 = vst [vmem:[#allocation2 + $0xc8] sm:$0xff] %v732
          %765 = vst [vmem:[#allocation2 + $0xd0] sm:$0xff] %v733
          %766 = vst [vmem:[#allocation2 + $0xd8] sm:$0xff] %v734
          %767 = vst [vmem:[#allocation2 + $0xe0] sm:$0xff] %v735
          %768 = vst [vmem:[#allocation2 + $0xe8] sm:$0xff] %v736
          %769 = vst [vmem:[#allocation2 + $0xf0] sm:$0xff] %v737
          %770 = vst [vmem:[#allocation2 + $0xf8] sm:$0xff] %v738
          %771 = vst [vmem:[#allocation3] sm:$0xff] 0.0
          %772 = vst [vmem:[#allocation3 + $0x8] sm:$0xff] 0.0
          %773 = vst [vmem:[#allocation3 + $0x10] sm:$0xff] 0.0
          %774 = vst [vmem:[#allocation3 + $0x18] sm:$0xff] 0.0
          %775 = vst [vmem:[#allocation3 + $0x20] sm:$0xff] 0.0
          %776 = vst [vmem:[#allocation3 + $0x28] sm:$0xff] 0.0
          %777 = vst [vmem:[#allocation3 + $0x30] sm:$0xff] 0.0
          %778 = vst [vmem:[#allocation3 + $0x38] sm:$0xff] 0.0
          %779 = vst [vmem:[#allocation3 + $0x40] sm:$0xff] 0.0
          %780 = vst [vmem:[#allocation3 + $0x48] sm:$0xff] 0.0
          %781 = vst [vmem:[#allocation3 + $0x50] sm:$0xff] 0.0
          %782 = vst [vmem:[#allocation3 + $0x58] sm:$0xff] 0.0
          %783 = vst [vmem:[#allocation3 + $0x60] sm:$0xff] 0.0
          %784 = vst [vmem:[#allocation3 + $0x68] sm:$0xff] 0.0
          %785 = vst [vmem:[#allocation3 + $0x70] sm:$0xff] 0.0
          %786 = vst [vmem:[#allocation3 + $0x78] sm:$0xff] 0.0
          %787 = vst [vmem:[#allocation3 + $0x80] sm:$0xff] 0.0
          %788 = vst [vmem:[#allocation3 + $0x88] sm:$0xff] 0.0
          %789 = vst [vmem:[#allocation3 + $0x90] sm:$0xff] 0.0
          %790 = vst [vmem:[#allocation3 + $0x98] sm:$0xff] 0.0
          %791 = vst [vmem:[#allocation3 + $0xa0] sm:$0xff] 0.0
          %792 = vst [vmem:[#allocation3 + $0xa8] sm:$0xff] 0.0
          %793 = vst [vmem:[#allocation3 + $0xb0] sm:$0xff] 0.0
          %794 = vst [vmem:[#allocation3 + $0xb8] sm:$0xff] 0.0
          %795 = vst [vmem:[#allocation3 + $0xc0] sm:$0xff] 0.0
          %796 = vst [vmem:[#allocation3 + $0xc8] sm:$0xff] 0.0
          %797 = vst [vmem:[#allocation3 + $0xd0] sm:$0xff] 0.0
          %798 = vst [vmem:[#allocation3 + $0xd8] sm:$0xff] 0.0
          %799 = vst [vmem:[#allocation3 + $0xe0] sm:$0xff] 0.0
          %800 = vst [vmem:[#allocation3 + $0xe8] sm:$0xff] 0.0
          %801 = vst [vmem:[#allocation3 + $0xf0] sm:$0xff] 0.0
          %802 = vst [vmem:[#allocation3 + $0xf8] sm:$0xff] 0.0
        $region60: #{tpu_custom_call.1} parent=51 // pred_fallthru
          _
        %v803 = vld [vmem:[%s364] sm:$0x1]
        %v804 = vld [vmem:[%s2] sm:$0xff]
        %v805 = vld [vmem:[%s2 + $0x8] sm:$0xff]
        %v806 = vld [vmem:[%s2 + $0x10] sm:$0xff]
        %v807 = vld [vmem:[%s2 + $0x18] sm:$0xff]
        %v808 = vld [vmem:[%s2 + $0x20] sm:$0xff]
        %v809 = vld [vmem:[%s2 + $0x28] sm:$0xff]
        %v810 = vld [vmem:[%s2 + $0x30] sm:$0xff]
        %v811 = vld [vmem:[%s2 + $0x38] sm:$0xff]
        %813 = vset.pattern.permute.xlu0 0
        %814 = vperm.xlu0 %813, %v804
        %v815 = vpop.permute.xlu0 %814
        %818 = vset.pattern.permute.xlu0 0
        %819 = vperm.xlu0 %818, %v805
        %v820 = vpop.permute.xlu0 %819
        %823 = vset.pattern.permute.xlu0 0
        %824 = vperm.xlu0 %823, %v806
        %v825 = vpop.permute.xlu0 %824
        %828 = vset.pattern.permute.xlu0 0
        %829 = vperm.xlu0 %828, %v807
        %v830 = vpop.permute.xlu0 %829
        %833 = vset.pattern.permute.xlu0 0
        %834 = vperm.xlu0 %833, %v808
        %v835 = vpop.permute.xlu0 %834
        %838 = vset.pattern.permute.xlu0 0
        %839 = vperm.xlu0 %838, %v809
        %v840 = vpop.permute.xlu0 %839
        %843 = vset.pattern.permute.xlu0 0
        %844 = vperm.xlu0 %843, %v810
        %v845 = vpop.permute.xlu0 %844
        %848 = vset.pattern.permute.xlu0 0
        %849 = vperm.xlu0 %848, %v811
        %v850 = vpop.permute.xlu0 %849
        %v853 = vlaneseq
        %v854 = vshrl.u32 %v853, 7
        %v855 = vsub.s32 0, %v854
        %v856 = vrot.slane %v803, %v855
        %v858 = vmul.f32 %v815, %v856
        %v859 = vmul.f32 %v820, %v856
        %v860 = vmul.f32 %v825, %v856
        %v861 = vmul.f32 %v830, %v856
        %v862 = vmul.f32 %v835, %v856
        %v863 = vmul.f32 %v840, %v856
        %v864 = vmul.f32 %v845, %v856
        %v865 = vmul.f32 %v850, %v856
        %v866 = vld [vmem:[%s3] sm:$0xff]
        %v867 = vld [vmem:[%s3 + $0x8] sm:$0xff]
        %v868 = vld [vmem:[%s3 + $0x10] sm:$0xff]
        %v869 = vld [vmem:[%s3 + $0x18] sm:$0xff]
        %v870 = vld [vmem:[%s3 + $0x20] sm:$0xff]
        %v871 = vld [vmem:[%s3 + $0x28] sm:$0xff]
        %v872 = vld [vmem:[%s3 + $0x30] sm:$0xff]
        %v873 = vld [vmem:[%s3 + $0x38] sm:$0xff]
        %875 = vset.pattern.permute.xlu0 0
        %876 = vperm.xlu0 %875, %v866
        %v877 = vpop.permute.xlu0 %876
        %880 = vset.pattern.permute.xlu0 0
        %881 = vperm.xlu0 %880, %v867
        %v882 = vpop.permute.xlu0 %881
        %885 = vset.pattern.permute.xlu0 0
        %886 = vperm.xlu0 %885, %v868
        %v887 = vpop.permute.xlu0 %886
        %890 = vset.pattern.permute.xlu0 0
        %891 = vperm.xlu0 %890, %v869
        %v892 = vpop.permute.xlu0 %891
        %895 = vset.pattern.permute.xlu0 0
        %896 = vperm.xlu0 %895, %v870
        %v897 = vpop.permute.xlu0 %896
        %900 = vset.pattern.permute.xlu0 0
        %901 = vperm.xlu0 %900, %v871
        %v902 = vpop.permute.xlu0 %901
        %905 = vset.pattern.permute.xlu0 0
        %906 = vperm.xlu0 %905, %v872
        %v907 = vpop.permute.xlu0 %906
        %910 = vset.pattern.permute.xlu0 0
        %911 = vperm.xlu0 %910, %v873
        %v912 = vpop.permute.xlu0 %911
        %v914 = vadd.f32 %v858, %v877
        %v915 = vadd.f32 %v859, %v882
        %v916 = vadd.f32 %v860, %v887
        %v917 = vadd.f32 %v861, %v892
        %v918 = vadd.f32 %v862, %v897
        %v919 = vadd.f32 %v863, %v902
        %v920 = vadd.f32 %v864, %v907
        %v921 = vadd.f32 %v865, %v912
        %v922 = vmax.f32 %v914, 0.0
        %v923 = vmax.f32 %v915, 0.0
        %v924 = vmax.f32 %v916, 0.0
        %v925 = vmax.f32 %v917, 0.0
        %v926 = vmax.f32 %v918, 0.0
        %v927 = vmax.f32 %v919, 0.0
        %v928 = vmax.f32 %v920, 0.0
        %v929 = vmax.f32 %v921, 0.0
        %v930 = vld [vmem:[%s4] sm:$0xf]
        %v931 = vld [vmem:[%s4 + $0x4] sm:$0xf]
        %v932 = vld [vmem:[%s4 + $0x8] sm:$0xf]
        %v933 = vld [vmem:[%s4 + $0xc] sm:$0xf]
        %v934 = vld [vmem:[%s4 + $0x10] sm:$0xf]
        %v935 = vld [vmem:[%s4 + $0x14] sm:$0xf]
        %v936 = vld [vmem:[%s4 + $0x18] sm:$0xf]
        %v937 = vld [vmem:[%s4 + $0x1c] sm:$0xf]
        %v938 = vld [vmem:[%s4 + $0x20] sm:$0xf]
        %v939 = vld [vmem:[%s4 + $0x24] sm:$0xf]
        %v940 = vld [vmem:[%s4 + $0x28] sm:$0xf]
        %v941 = vld [vmem:[%s4 + $0x2c] sm:$0xf]
        %v942 = vld [vmem:[%s4 + $0x30] sm:$0xf]
        %v943 = vld [vmem:[%s4 + $0x34] sm:$0xf]
        %v944 = vld [vmem:[%s4 + $0x38] sm:$0xf]
        %v945 = vld [vmem:[%s4 + $0x3c] sm:$0xf]
        %v946 = vld [vmem:[%s4 + $0x40] sm:$0xf]
        %v947 = vld [vmem:[%s4 + $0x44] sm:$0xf]
        %v948 = vld [vmem:[%s4 + $0x48] sm:$0xf]
        %v949 = vld [vmem:[%s4 + $0x4c] sm:$0xf]
        %v950 = vld [vmem:[%s4 + $0x50] sm:$0xf]
        %v951 = vld [vmem:[%s4 + $0x54] sm:$0xf]
        %v952 = vld [vmem:[%s4 + $0x58] sm:$0xf]
        %v953 = vld [vmem:[%s4 + $0x5c] sm:$0xf]
        %v954 = vld [vmem:[%s4 + $0x60] sm:$0xf]
        %v955 = vld [vmem:[%s4 + $0x64] sm:$0xf]
        %v956 = vld [vmem:[%s4 + $0x68] sm:$0xf]
        %v957 = vld [vmem:[%s4 + $0x6c] sm:$0xf]
        %v958 = vld [vmem:[%s4 + $0x70] sm:$0xf]
        %v959 = vld [vmem:[%s4 + $0x74] sm:$0xf]
        %v960 = vld [vmem:[%s4 + $0x78] sm:$0xf]
        %v961 = vld [vmem:[%s4 + $0x7c] sm:$0xf]
        %v962 = vpack.c.bf16 %v923, %v922
        %v963 = vpack.c.bf16 %v925, %v924
        %v964 = vpack.c.bf16 %v927, %v926
        %v965 = vpack.c.bf16 %v929, %v928
        %v998 = vunpack.c.l.b16 %v930
        %v999 = vunpack.c.l.b16 %v931
        %v1000 = vunpack.c.l.b16 %v932
        %v1001 = vunpack.c.l.b16 %v933
        %v1002 = vunpack.c.l.b16 %v934
        %v1003 = vunpack.c.l.b16 %v935
        %v1004 = vunpack.c.l.b16 %v936
        %v1005 = vunpack.c.l.b16 %v937
        %v1006 = vunpack.c.l.b16 %v938
        %v1007 = vunpack.c.l.b16 %v939
        %v1008 = vunpack.c.l.b16 %v940
        %v1009 = vunpack.c.l.b16 %v941
        %v1010 = vunpack.c.l.b16 %v942
        %v1011 = vunpack.c.l.b16 %v943
        %v1012 = vunpack.c.l.b16 %v944
        %v1013 = vunpack.c.l.b16 %v945
        %v1014 = vunpack.c.l.b16 %v946
        %v1015 = vunpack.c.l.b16 %v947
        %v1016 = vunpack.c.l.b16 %v948
        %v1017 = vunpack.c.l.b16 %v949
        %v1018 = vunpack.c.l.b16 %v950
        %v1019 = vunpack.c.l.b16 %v951
        %v1020 = vunpack.c.l.b16 %v952
        %v1021 = vunpack.c.l.b16 %v953
        %v1022 = vunpack.c.l.b16 %v954
        %v1023 = vunpack.c.l.b16 %v955
        %v1024 = vunpack.c.l.b16 %v956
        %v1025 = vunpack.c.l.b16 %v957
        %v1026 = vunpack.c.l.b16 %v958
        %v1027 = vunpack.c.l.b16 %v959
        %v1028 = vunpack.c.l.b16 %v960
        %v1029 = vunpack.c.l.b16 %v961
        %v1030 = vpack.c.b16 %v999, %v998
        %v1031 = vpack.c.b16 %v1001, %v1000
        %v1032 = vpack.c.b16 %v1003, %v1002
        %v1033 = vpack.c.b16 %v1005, %v1004
        %v1034 = vpack.c.b16 %v1007, %v1006
        %v1035 = vpack.c.b16 %v1009, %v1008
        %v1036 = vpack.c.b16 %v1011, %v1010
        %v1037 = vpack.c.b16 %v1013, %v1012
        %v1038 = vpack.c.b16 %v1015, %v1014
        %v1039 = vpack.c.b16 %v1017, %v1016
        %v1040 = vpack.c.b16 %v1019, %v1018
        %v1041 = vpack.c.b16 %v1021, %v1020
        %v1042 = vpack.c.b16 %v1023, %v1022
        %v1043 = vpack.c.b16 %v1025, %v1024
        %v1044 = vpack.c.b16 %v1027, %v1026
        %v1045 = vpack.c.b16 %v1029, %v1028
        %vm1046 = vcmask 523264
        %v1048 = vsel %vm1046, %v1030, 0
        %v1051 = vsel %vm1046, %v1031, 0
        %v1054 = vsel %vm1046, %v1032, 0
        %v1057 = vsel %vm1046, %v1033, 0
        %v1060 = vsel %vm1046, %v1034, 0
        %v1063 = vsel %vm1046, %v1035, 0
        %v1066 = vsel %vm1046, %v1036, 0
        %v1069 = vsel %vm1046, %v1037, 0
        %v1072 = vsel %vm1046, %v1038, 0
        %v1075 = vsel %vm1046, %v1039, 0
        %v1078 = vsel %vm1046, %v1040, 0
        %v1081 = vsel %vm1046, %v1041, 0
        %v1084 = vsel %vm1046, %v1042, 0
        %v1087 = vsel %vm1046, %v1043, 0
        %v1090 = vsel %vm1046, %v1044, 0
        %v1093 = vsel %vm1046, %v1045, 0
        %1095 = vmatprep.subr.bf16.mxu0 0
        %1096 = vmatpush1.bf16.msra.mxu0 %v962
        %1097 = vmatprep.subr.bf16.mxu0 0
        %1098 = vmatpush1.bf16.msra.mxu0 %v963
        %1099 = vmatprep.subr.bf16.mxu0 0
        %1100 = vmatpush1.bf16.msra.mxu0 %v964
        %1101 = vmatprep.subr.bf16.mxu0 0
        %1102 = vmatpush1.bf16.msra.mxu0 %v965
        %1103 = vmatprep.subr.bf16.mxu0 0
        %1104 = vmatpush1.bf16.msra.mxu0 0
        %1105 = vmatprep.subr.bf16.mxu0 0
        %1106 = vmatpush1.bf16.msra.mxu0 0
        %1107 = vmatprep.subr.bf16.mxu0 0
        %1108 = vmatpush1.bf16.msra.mxu0 0
        %1109 = vmatprep.subr.bf16.mxu0 0
        %1110 = vmatpush1.bf16.msra.mxu0 0
        %1111 = vmatprep.subr.bf16.mxu0 0
        %1112 = vmatpush1.bf16.msra.mxu0 0
        %1113 = vmatprep.subr.bf16.mxu0 0
        %1114 = vmatpush1.bf16.msra.mxu0 0
        %1115 = vmatprep.subr.bf16.mxu0 0
        %1116 = vmatpush1.bf16.msra.mxu0 0
        %1117 = vmatprep.subr.bf16.mxu0 0
        %1118 = vmatpush1.bf16.msra.mxu0 0
        %1119 = vmatprep.subr.bf16.mxu0 0
        %1120 = vmatpush1.bf16.msra.mxu0 0
        %1121 = vmatprep.subr.bf16.mxu0 0
        %1122 = vmatpush1.bf16.msra.mxu0 0
        %1123 = vmatprep.subr.bf16.mxu0 0
        %1124 = vmatpush1.bf16.msra.mxu0 0
        %1125 = vmatprep.subr.bf16.mxu0 0
        %1126 = vmatpush1.bf16.msra.mxu0 0
        %1127 = vmatprep.mubr.bf16.mxu0 0
        %1128 = vmatmul.mubr.bf16.gmra.mrb[0].mxu0 %v1048
        %v1129 = vpop.f32.mrb[0].mxu0
        %v1130 = vadd.f32 0.0, %v1129
        %v1131 = vpop.f32.mrb[0].mxu0
        %v1132 = vpop.f32.mrb[0].mxu0
        %v1133 = vadd.f32 0.0, %v1132
        %v1134 = vpop.f32.mrb[0].mxu0
        %1135 = vmatprep.mubr.bf16.mxu0 0
        %1136 = vmatmul.mubr.bf16.gmra.mrb[0].mxu0 %v1051
        %v1137 = vpop.f32.mrb[0].mxu0
        %v1138 = vadd.f32 0.0, %v1137
        %v1139 = vpop.f32.mrb[0].mxu0
        %v1140 = vpop.f32.mrb[0].mxu0
        %v1141 = vadd.f32 0.0, %v1140
        %v1142 = vpop.f32.mrb[0].mxu0
        %1143 = vmatprep.mubr.bf16.mxu0 0
        %1144 = vmatmul.mubr.bf16.gmra.mrb[0].mxu0 %v1054
        %v1145 = vpop.f32.mrb[0].mxu0
        %v1146 = vadd.f32 0.0, %v1145
        %v1147 = vpop.f32.mrb[0].mxu0
        %v1148 = vpop.f32.mrb[0].mxu0
        %v1149 = vadd.f32 0.0, %v1148
        %v1150 = vpop.f32.mrb[0].mxu0
        %1151 = vmatprep.mubr.bf16.mxu0 0
        %1152 = vmatmul.mubr.bf16.gmra.mrb[0].mxu0 %v1057
        %v1153 = vpop.f32.mrb[0].mxu0
        %v1154 = vadd.f32 0.0, %v1153
        %v1155 = vpop.f32.mrb[0].mxu0
        %v1156 = vpop.f32.mrb[0].mxu0
        %v1157 = vadd.f32 0.0, %v1156
        %v1158 = vpop.f32.mrb[0].mxu0
        %1159 = vmatprep.mubr.bf16.mxu0 0
        %1160 = vmatmul.mubr.bf16.gmra.mrb[0].mxu0 %v1060
        %v1161 = vpop.f32.mrb[0].mxu0
        %v1162 = vadd.f32 0.0, %v1161
        %v1163 = vpop.f32.mrb[0].mxu0
        %v1164 = vpop.f32.mrb[0].mxu0
        %v1165 = vadd.f32 0.0, %v1164
        %v1166 = vpop.f32.mrb[0].mxu0
        %1167 = vmatprep.mubr.bf16.mxu0 0
        %1168 = vmatmul.mubr.bf16.gmra.mrb[0].mxu0 %v1063
        %v1169 = vpop.f32.mrb[0].mxu0
        %v1170 = vadd.f32 0.0, %v1169
        %v1171 = vpop.f32.mrb[0].mxu0
        %v1172 = vpop.f32.mrb[0].mxu0
        %v1173 = vadd.f32 0.0, %v1172
        %v1174 = vpop.f32.mrb[0].mxu0
        %1175 = vmatprep.mubr.bf16.mxu0 0
        %1176 = vmatmul.mubr.bf16.gmra.mrb[0].mxu0 %v1066
        %v1177 = vpop.f32.mrb[0].mxu0
        %v1178 = vadd.f32 0.0, %v1177
        %v1179 = vpop.f32.mrb[0].mxu0
        %v1180 = vpop.f32.mrb[0].mxu0
        %v1181 = vadd.f32 0.0, %v1180
        %v1182 = vpop.f32.mrb[0].mxu0
        %1183 = vmatprep.mubr.bf16.mxu0 0
        %1184 = vmatmul.mubr.bf16.gmra.mrb[0].mxu0 %v1069
        %v1185 = vpop.f32.mrb[0].mxu0
        %v1186 = vadd.f32 0.0, %v1185
        %v1187 = vpop.f32.mrb[0].mxu0
        %v1188 = vpop.f32.mrb[0].mxu0
        %v1189 = vadd.f32 0.0, %v1188
        %v1190 = vpop.f32.mrb[0].mxu0
        %1191 = vmatprep.mubr.bf16.mxu0 0
        %1192 = vmatmul.mubr.bf16.gmra.mrb[0].mxu0 %v1072
        %v1193 = vpop.f32.mrb[0].mxu0
        %v1194 = vadd.f32 0.0, %v1193
        %v1195 = vpop.f32.mrb[0].mxu0
        %v1196 = vpop.f32.mrb[0].mxu0
        %v1197 = vadd.f32 0.0, %v1196
        %v1198 = vpop.f32.mrb[0].mxu0
        %1199 = vmatprep.mubr.bf16.mxu0 0
        %1200 = vmatmul.mubr.bf16.gmra.mrb[0].mxu0 %v1075
        %v1201 = vpop.f32.mrb[0].mxu0
        %v1202 = vadd.f32 0.0, %v1201
        %v1203 = vpop.f32.mrb[0].mxu0
        %v1204 = vpop.f32.mrb[0].mxu0
        %v1205 = vadd.f32 0.0, %v1204
        %v1206 = vpop.f32.mrb[0].mxu0
        %1207 = vmatprep.mubr.bf16.mxu0 0
        %1208 = vmatmul.mubr.bf16.gmra.mrb[0].mxu0 %v1078
        %v1209 = vpop.f32.mrb[0].mxu0
        %v1210 = vadd.f32 0.0, %v1209
        %v1211 = vpop.f32.mrb[0].mxu0
        %v1212 = vpop.f32.mrb[0].mxu0
        %v1213 = vadd.f32 0.0, %v1212
        %v1214 = vpop.f32.mrb[0].mxu0
        %1215 = vmatprep.mubr.bf16.mxu0 0
        %1216 = vmatmul.mubr.bf16.gmra.mrb[0].mxu0 %v1081
        %v1217 = vpop.f32.mrb[0].mxu0
        %v1218 = vadd.f32 0.0, %v1217
        %v1219 = vpop.f32.mrb[0].mxu0
        %v1220 = vpop.f32.mrb[0].mxu0
        %v1221 = vadd.f32 0.0, %v1220
        %v1222 = vpop.f32.mrb[0].mxu0
        %1223 = vmatprep.mubr.bf16.mxu0 0
        %1224 = vmatmul.mubr.bf16.gmra.mrb[0].mxu0 %v1084
        %v1225 = vpop.f32.mrb[0].mxu0
        %v1226 = vadd.f32 0.0, %v1225
        %v1227 = vpop.f32.mrb[0].mxu0
        %v1228 = vpop.f32.mrb[0].mxu0
        %v1229 = vadd.f32 0.0, %v1228
        %v1230 = vpop.f32.mrb[0].mxu0
        %1231 = vmatprep.mubr.bf16.mxu0 0
        %1232 = vmatmul.mubr.bf16.gmra.mrb[0].mxu0 %v1087
        %v1233 = vpop.f32.mrb[0].mxu0
        %v1234 = vadd.f32 0.0, %v1233
        %v1235 = vpop.f32.mrb[0].mxu0
        %v1236 = vpop.f32.mrb[0].mxu0
        %v1237 = vadd.f32 0.0, %v1236
        %v1238 = vpop.f32.mrb[0].mxu0
        %1239 = vmatprep.mubr.bf16.mxu0 0
        %1240 = vmatmul.mubr.bf16.gmra.mrb[0].mxu0 %v1090
        %v1241 = vpop.f32.mrb[0].mxu0
        %v1242 = vadd.f32 0.0, %v1241
        %v1243 = vpop.f32.mrb[0].mxu0
        %v1244 = vpop.f32.mrb[0].mxu0
        %v1245 = vadd.f32 0.0, %v1244
        %v1246 = vpop.f32.mrb[0].mxu0
        %1247 = vmatprep.mubr.bf16.mxu0 0
        %1248 = vmatmul.mubr.bf16.gmra.mrb[0].mxu0 %v1093
        %v1249 = vpop.f32.mrb[0].mxu0
        %v1250 = vadd.f32 0.0, %v1249
        %v1251 = vpop.f32.mrb[0].mxu0
        %v1252 = vpop.f32.mrb[0].mxu0
        %v1253 = vadd.f32 0.0, %v1252
        %v1254 = vpop.f32.mrb[0].mxu0
        %1255 = vdwg.mxu0
        %v1256 = vld [vmem:[#allocation2] sm:$0xff]
        %v1257 = vld [vmem:[#allocation2 + $0x8] sm:$0xff]
        %v1258 = vld [vmem:[#allocation2 + $0x10] sm:$0xff]
        %v1259 = vld [vmem:[#allocation2 + $0x18] sm:$0xff]
        %v1260 = vld [vmem:[#allocation2 + $0x20] sm:$0xff]
        %v1261 = vld [vmem:[#allocation2 + $0x28] sm:$0xff]
        %v1262 = vld [vmem:[#allocation2 + $0x30] sm:$0xff]
        %v1263 = vld [vmem:[#allocation2 + $0x38] sm:$0xff]
        %v1264 = vld [vmem:[#allocation2 + $0x40] sm:$0xff]
        %v1265 = vld [vmem:[#allocation2 + $0x48] sm:$0xff]
        %v1266 = vld [vmem:[#allocation2 + $0x50] sm:$0xff]
        %v1267 = vld [vmem:[#allocation2 + $0x58] sm:$0xff]
        %v1268 = vld [vmem:[#allocation2 + $0x60] sm:$0xff]
        %v1269 = vld [vmem:[#allocation2 + $0x68] sm:$0xff]
        %v1270 = vld [vmem:[#allocation2 + $0x70] sm:$0xff]
        %v1271 = vld [vmem:[#allocation2 + $0x78] sm:$0xff]
        %v1272 = vld [vmem:[#allocation2 + $0x80] sm:$0xff]
        %v1273 = vld [vmem:[#allocation2 + $0x88] sm:$0xff]
        %v1274 = vld [vmem:[#allocation2 + $0x90] sm:$0xff]
        %v1275 = vld [vmem:[#allocation2 + $0x98] sm:$0xff]
        %v1276 = vld [vmem:[#allocation2 + $0xa0] sm:$0xff]
        %v1277 = vld [vmem:[#allocation2 + $0xa8] sm:$0xff]
        %v1278 = vld [vmem:[#allocation2 + $0xb0] sm:$0xff]
        %v1279 = vld [vmem:[#allocation2 + $0xb8] sm:$0xff]
        %v1280 = vld [vmem:[#allocation2 + $0xc0] sm:$0xff]
        %v1281 = vld [vmem:[#allocation2 + $0xc8] sm:$0xff]
        %v1282 = vld [vmem:[#allocation2 + $0xd0] sm:$0xff]
        %v1283 = vld [vmem:[#allocation2 + $0xd8] sm:$0xff]
        %v1284 = vld [vmem:[#allocation2 + $0xe0] sm:$0xff]
        %v1285 = vld [vmem:[#allocation2 + $0xe8] sm:$0xff]
        %v1286 = vld [vmem:[#allocation2 + $0xf0] sm:$0xff]
        %v1287 = vld [vmem:[#allocation2 + $0xf8] sm:$0xff]
        %v1288 = vpack.c.bf16 %v1133, %v1130
        %v1289 = vpack.c.bf16 %v1141, %v1138
        %v1290 = vpack.c.bf16 %v1149, %v1146
        %v1291 = vpack.c.bf16 %v1157, %v1154
        %v1292 = vpack.c.bf16 %v1165, %v1162
        %v1293 = vpack.c.bf16 %v1173, %v1170
        %v1294 = vpack.c.bf16 %v1181, %v1178
        %v1295 = vpack.c.bf16 %v1189, %v1186
        %v1296 = vpack.c.bf16 %v1197, %v1194
        %v1297 = vpack.c.bf16 %v1205, %v1202
        %v1298 = vpack.c.bf16 %v1213, %v1210
        %v1299 = vpack.c.bf16 %v1221, %v1218
        %v1300 = vpack.c.bf16 %v1229, %v1226
        %v1301 = vpack.c.bf16 %v1237, %v1234
        %v1302 = vpack.c.bf16 %v1245, %v1242
        %v1303 = vpack.c.bf16 %v1253, %v1250
        %1304 = vmatprep.subr.bf16.mxu0 0
        %1305 = vmatpush1.bf16.msra.mxu0 %v1288
        %1306 = vmatprep.subr.bf16.mxu0 0
        %1307 = vmatpush1.bf16.msra.mxu0 %v1289
        %1308 = vmatprep.subr.bf16.mxu0 0
        %1309 = vmatpush1.bf16.msra.mxu0 %v1290
        %1310 = vmatprep.subr.bf16.mxu0 0
        %1311 = vmatpush1.bf16.msra.mxu0 %v1291
        %1312 = vmatprep.subr.bf16.mxu0 0
        %1313 = vmatpush1.bf16.msra.mxu0 %v1292
        %1314 = vmatprep.subr.bf16.mxu0 0
        %1315 = vmatpush1.bf16.msra.mxu0 %v1293
        %1316 = vmatprep.subr.bf16.mxu0 0
        %1317 = vmatpush1.bf16.msra.mxu0 %v1294
        %1318 = vmatprep.subr.bf16.mxu0 0
        %1319 = vmatpush1.bf16.msra.mxu0 %v1295
        %1320 = vmatprep.subr.bf16.mxu0 0
        %1321 = vmatpush1.bf16.msra.mxu0 %v1296
        %1322 = vmatprep.subr.bf16.mxu0 0
        %1323 = vmatpush1.bf16.msra.mxu0 %v1297
        %1324 = vmatprep.subr.bf16.mxu0 0
        %1325 = vmatpush1.bf16.msra.mxu0 %v1298
        %1326 = vmatprep.subr.bf16.mxu0 0
        %1327 = vmatpush1.bf16.msra.mxu0 %v1299
        %1328 = vmatprep.subr.bf16.mxu0 0
        %1329 = vmatpush1.bf16.msra.mxu0 %v1300
        %1330 = vmatprep.subr.bf16.mxu0 0
        %1331 = vmatpush1.bf16.msra.mxu0 %v1301
        %1332 = vmatprep.subr.bf16.mxu0 0
        %1333 = vmatpush1.bf16.msra.mxu0 %v1302
        %1334 = vmatprep.subr.bf16.mxu0 0
        %1335 = vmatpush1.bf16.msra.mxu0 %v1303
        %1336 = vmatprep.mubr.bf16.mxu0 %v1257
        %1337 = vmatmul.mubr.bf16.gmra.mrb[0].mxu0 %v1256
        %v1338 = vpop.f32.mrb[0].mxu0
        %v1339 = vadd.f32 0.0, %v1338
        %v1340 = vpop.f32.mrb[0].mxu0
        %v1341 = vpop.f32.mrb[0].mxu0
        %v1342 = vadd.f32 0.0, %v1341
        %v1343 = vpop.f32.mrb[0].mxu0
        %1344 = vmatprep.mubr.bf16.mxu0 %v1259
        %1345 = vmatmul.mubr.bf16.gmra.mrb[0].mxu0 %v1258
        %v1346 = vpop.f32.mrb[0].mxu0
        %v1347 = vadd.f32 0.0, %v1346
        %v1348 = vpop.f32.mrb[0].mxu0
        %v1349 = vpop.f32.mrb[0].mxu0
        %v1350 = vadd.f32 0.0, %v1349
        %v1351 = vpop.f32.mrb[0].mxu0
        %1352 = vmatprep.mubr.bf16.mxu0 %v1261
        %1353 = vmatmul.mubr.bf16.gmra.mrb[0].mxu0 %v1260
        %v1354 = vpop.f32.mrb[0].mxu0
        %v1355 = vadd.f32 0.0, %v1354
        %v1356 = vpop.f32.mrb[0].mxu0
        %v1357 = vpop.f32.mrb[0].mxu0
        %v1358 = vadd.f32 0.0, %v1357
        %v1359 = vpop.f32.mrb[0].mxu0
        %1360 = vmatprep.mubr.bf16.mxu0 %v1263
        %1361 = vmatmul.mubr.bf16.gmra.mrb[0].mxu0 %v1262
        %v1362 = vpop.f32.mrb[0].mxu0
        %v1363 = vadd.f32 0.0, %v1362
        %v1364 = vpop.f32.mrb[0].mxu0
        %v1365 = vpop.f32.mrb[0].mxu0
        %v1366 = vadd.f32 0.0, %v1365
        %v1367 = vpop.f32.mrb[0].mxu0
        %1368 = vmatprep.mubr.bf16.mxu0 %v1265
        %1369 = vmatmul.mubr.bf16.gmra.mrb[0].mxu0 %v1264
        %v1370 = vpop.f32.mrb[0].mxu0
        %v1371 = vadd.f32 0.0, %v1370
        %v1372 = vpop.f32.mrb[0].mxu0
        %v1373 = vpop.f32.mrb[0].mxu0
        %v1374 = vadd.f32 0.0, %v1373
        %v1375 = vpop.f32.mrb[0].mxu0
        %1376 = vmatprep.mubr.bf16.mxu0 %v1267
        %1377 = vmatmul.mubr.bf16.gmra.mrb[0].mxu0 %v1266
        %v1378 = vpop.f32.mrb[0].mxu0
        %v1379 = vadd.f32 0.0, %v1378
        %v1380 = vpop.f32.mrb[0].mxu0
        %v1381 = vpop.f32.mrb[0].mxu0
        %v1382 = vadd.f32 0.0, %v1381
        %v1383 = vpop.f32.mrb[0].mxu0
        %1384 = vmatprep.mubr.bf16.mxu0 %v1269
        %1385 = vmatmul.mubr.bf16.gmra.mrb[0].mxu0 %v1268
        %v1386 = vpop.f32.mrb[0].mxu0
        %v1387 = vadd.f32 0.0, %v1386
        %v1388 = vpop.f32.mrb[0].mxu0
        %v1389 = vpop.f32.mrb[0].mxu0
        %v1390 = vadd.f32 0.0, %v1389
        %v1391 = vpop.f32.mrb[0].mxu0
        %1392 = vmatprep.mubr.bf16.mxu0 %v1271
        %1393 = vmatmul.mubr.bf16.gmra.mrb[0].mxu0 %v1270
        %v1394 = vpop.f32.mrb[0].mxu0
        %v1395 = vadd.f32 0.0, %v1394
        %v1396 = vpop.f32.mrb[0].mxu0
        %v1397 = vpop.f32.mrb[0].mxu0
        %v1398 = vadd.f32 0.0, %v1397
        %v1399 = vpop.f32.mrb[0].mxu0
        %1400 = vmatprep.mubr.bf16.mxu0 %v1273
        %1401 = vmatmul.mubr.bf16.gmra.mrb[0].mxu0 %v1272
        %v1402 = vpop.f32.mrb[0].mxu0
        %v1403 = vadd.f32 0.0, %v1402
        %v1404 = vpop.f32.mrb[0].mxu0
        %v1405 = vpop.f32.mrb[0].mxu0
        %v1406 = vadd.f32 0.0, %v1405
        %v1407 = vpop.f32.mrb[0].mxu0
        %1408 = vmatprep.mubr.bf16.mxu0 %v1275
        %1409 = vmatmul.mubr.bf16.gmra.mrb[0].mxu0 %v1274
        %v1410 = vpop.f32.mrb[0].mxu0
        %v1411 = vadd.f32 0.0, %v1410
        %v1412 = vpop.f32.mrb[0].mxu0
        %v1413 = vpop.f32.mrb[0].mxu0
        %v1414 = vadd.f32 0.0, %v1413
        %v1415 = vpop.f32.mrb[0].mxu0
        %1416 = vmatprep.mubr.bf16.mxu0 %v1277
        %1417 = vmatmul.mubr.bf16.gmra.mrb[0].mxu0 %v1276
        %v1418 = vpop.f32.mrb[0].mxu0
        %v1419 = vadd.f32 0.0, %v1418
        %v1420 = vpop.f32.mrb[0].mxu0
        %v1421 = vpop.f32.mrb[0].mxu0
        %v1422 = vadd.f32 0.0, %v1421
        %v1423 = vpop.f32.mrb[0].mxu0
        %1424 = vmatprep.mubr.bf16.mxu0 %v1279
        %1425 = vmatmul.mubr.bf16.gmra.mrb[0].mxu0 %v1278
        %v1426 = vpop.f32.mrb[0].mxu0
        %v1427 = vadd.f32 0.0, %v1426
        %v1428 = vpop.f32.mrb[0].mxu0
        %v1429 = vpop.f32.mrb[0].mxu0
        %v1430 = vadd.f32 0.0, %v1429
        %v1431 = vpop.f32.mrb[0].mxu0
        %1432 = vmatprep.mubr.bf16.mxu0 %v1281
        %1433 = vmatmul.mubr.bf16.gmra.mrb[0].mxu0 %v1280
        %v1434 = vpop.f32.mrb[0].mxu0
        %v1435 = vadd.f32 0.0, %v1434
        %v1436 = vpop.f32.mrb[0].mxu0
        %v1437 = vpop.f32.mrb[0].mxu0
        %v1438 = vadd.f32 0.0, %v1437
        %v1439 = vpop.f32.mrb[0].mxu0
        %1440 = vmatprep.mubr.bf16.mxu0 %v1283
        %1441 = vmatmul.mubr.bf16.gmra.mrb[0].mxu0 %v1282
        %v1442 = vpop.f32.mrb[0].mxu0
        %v1443 = vadd.f32 0.0, %v1442
        %v1444 = vpop.f32.mrb[0].mxu0
        %v1445 = vpop.f32.mrb[0].mxu0
        %v1446 = vadd.f32 0.0, %v1445
        %v1447 = vpop.f32.mrb[0].mxu0
        %1448 = vmatprep.mubr.bf16.mxu0 %v1285
        %1449 = vmatmul.mubr.bf16.gmra.mrb[0].mxu0 %v1284
        %v1450 = vpop.f32.mrb[0].mxu0
        %v1451 = vadd.f32 0.0, %v1450
        %v1452 = vpop.f32.mrb[0].mxu0
        %v1453 = vpop.f32.mrb[0].mxu0
        %v1454 = vadd.f32 0.0, %v1453
        %v1455 = vpop.f32.mrb[0].mxu0
        %1456 = vmatprep.mubr.bf16.mxu0 %v1287
        %1457 = vmatmul.mubr.bf16.gmra.mrb[0].mxu0 %v1286
        %v1458 = vpop.f32.mrb[0].mxu0
        %v1459 = vadd.f32 0.0, %v1458
        %v1460 = vpop.f32.mrb[0].mxu0
        %v1461 = vpop.f32.mrb[0].mxu0
        %v1462 = vadd.f32 0.0, %v1461
        %v1463 = vpop.f32.mrb[0].mxu0
        %1464 = vdwg.mxu0
        %v1465 = vmax.f32 %v1339, %v1355
        %v1466 = vmax.f32 %v1342, %v1358
        %v1467 = vmax.f32 %v1347, %v1363
        %v1468 = vmax.f32 %v1350, %v1366
        %v1469 = vmax.f32 %v1465, %v1371
        %v1470 = vmax.f32 %v1466, %v1374
        %v1471 = vmax.f32 %v1467, %v1379
        %v1472 = vmax.f32 %v1468, %v1382
        %v1473 = vmax.f32 %v1469, %v1387
        %v1474 = vmax.f32 %v1470, %v1390
        %v1475 = vmax.f32 %v1471, %v1395
        %v1476 = vmax.f32 %v1472, %v1398
        %v1477 = vmax.f32 %v1473, %v1403
        %v1478 = vmax.f32 %v1474, %v1406
        %v1479 = vmax.f32 %v1475, %v1411
        %v1480 = vmax.f32 %v1476, %v1414
        %v1481 = vmax.f32 %v1477, %v1419
        %v1482 = vmax.f32 %v1478, %v1422
        %v1483 = vmax.f32 %v1479, %v1427
        %v1484 = vmax.f32 %v1480, %v1430
        %v1485 = vmax.f32 %v1481, %v1435
        %v1486 = vmax.f32 %v1482, %v1438
        %v1487 = vmax.f32 %v1483, %v1443
        %v1488 = vmax.f32 %v1484, %v1446
        %v1489 = vmax.f32 %v1485, %v1451
        %v1490 = vmax.f32 %v1486, %v1454
        %v1491 = vmax.f32 %v1487, %v1459
        %v1492 = vmax.f32 %v1488, %v1462
        %v1493 = vmax.f32 %v1489, %v1490
        %v1494 = vmax.f32 %v1491, %v1492
        %v1495 = vmax.f32 %v1493, %v1494
        %v1496 = vrot.slane %v1495, 4
        %v1497 = vmax.f32 %v1495, %v1496
        %v1498 = vrot.slane %v1497, 2
        %v1499 = vmax.f32 %v1497, %v1498
        %v1500 = vrot.slane %v1499, 1
        %v1501 = vmax.f32 %v1499, %v1500
        %v1502 = vsub.f32 %v1339, %v1501
        %v1503 = vsub.f32 %v1342, %v1501
        %v1504 = vsub.f32 %v1347, %v1501
        %v1505 = vsub.f32 %v1350, %v1501
        %v1506 = vsub.f32 %v1355, %v1501
        %v1507 = vsub.f32 %v1358, %v1501
        %v1508 = vsub.f32 %v1363, %v1501
        %v1509 = vsub.f32 %v1366, %v1501
        %v1510 = vsub.f32 %v1371, %v1501
        %v1511 = vsub.f32 %v1374, %v1501
        %v1512 = vsub.f32 %v1379, %v1501
        %v1513 = vsub.f32 %v1382, %v1501
        %v1514 = vsub.f32 %v1387, %v1501
        %v1515 = vsub.f32 %v1390, %v1501
        %v1516 = vsub.f32 %v1395, %v1501
        %v1517 = vsub.f32 %v1398, %v1501
        %v1518 = vsub.f32 %v1403, %v1501
        %v1519 = vsub.f32 %v1406, %v1501
        %v1520 = vsub.f32 %v1411, %v1501
        %v1521 = vsub.f32 %v1414, %v1501
        %v1522 = vsub.f32 %v1419, %v1501
        %v1523 = vsub.f32 %v1422, %v1501
        %v1524 = vsub.f32 %v1427, %v1501
        %v1525 = vsub.f32 %v1430, %v1501
        %v1526 = vsub.f32 %v1435, %v1501
        %v1527 = vsub.f32 %v1438, %v1501
        %v1528 = vsub.f32 %v1443, %v1501
        %v1529 = vsub.f32 %v1446, %v1501
        %v1530 = vsub.f32 %v1451, %v1501
        %v1531 = vsub.f32 %v1454, %v1501
        %v1532 = vsub.f32 %v1459, %v1501
        %v1533 = vsub.f32 %v1462, %v1501
        %v1534 = vmul.f32 %v1502, 1.442695
        %v1535 = vpow.pop %v1534
        %v1536 = vmul.f32 %v1503, 1.442695
        %v1537 = vpow.pop %v1536
        %v1538 = vmul.f32 %v1504, 1.442695
        %v1539 = vpow.pop %v1538
        %v1540 = vmul.f32 %v1505, 1.442695
        %v1541 = vpow.pop %v1540
        %v1542 = vmul.f32 %v1506, 1.442695
        %v1543 = vpow.pop %v1542
        %v1544 = vmul.f32 %v1507, 1.442695
        %v1545 = vpow.pop %v1544
        %v1546 = vmul.f32 %v1508, 1.442695
        %v1547 = vpow.pop %v1546
        %v1548 = vmul.f32 %v1509, 1.442695
        %v1549 = vpow.pop %v1548
        %v1550 = vmul.f32 %v1510, 1.442695
        %v1551 = vpow.pop %v1550
        %v1552 = vmul.f32 %v1511, 1.442695
        %v1553 = vpow.pop %v1552
        %v1554 = vmul.f32 %v1512, 1.442695
        %v1555 = vpow.pop %v1554
        %v1556 = vmul.f32 %v1513, 1.442695
        %v1557 = vpow.pop %v1556
        %v1558 = vmul.f32 %v1514, 1.442695
        %v1559 = vpow.pop %v1558
        %v1560 = vmul.f32 %v1515, 1.442695
        %v1561 = vpow.pop %v1560
        %v1562 = vmul.f32 %v1516, 1.442695
        %v1563 = vpow.pop %v1562
        %v1564 = vmul.f32 %v1517, 1.442695
        %v1565 = vpow.pop %v1564
        %v1566 = vmul.f32 %v1518, 1.442695
        %v1567 = vpow.pop %v1566
        %v1568 = vmul.f32 %v1519, 1.442695
        %v1569 = vpow.pop %v1568
        %v1570 = vmul.f32 %v1520, 1.442695
        %v1571 = vpow.pop %v1570
        %v1572 = vmul.f32 %v1521, 1.442695
        %v1573 = vpow.pop %v1572
        %v1574 = vmul.f32 %v1522, 1.442695
        %v1575 = vpow.pop %v1574
        %v1576 = vmul.f32 %v1523, 1.442695
        %v1577 = vpow.pop %v1576
        %v1578 = vmul.f32 %v1524, 1.442695
        %v1579 = vpow.pop %v1578
        %v1580 = vmul.f32 %v1525, 1.442695
        %v1581 = vpow.pop %v1580
        %v1582 = vmul.f32 %v1526, 1.442695
        %v1583 = vpow.pop %v1582
        %v1584 = vmul.f32 %v1527, 1.442695
        %v1585 = vpow.pop %v1584
        %v1586 = vmul.f32 %v1528, 1.442695
        %v1587 = vpow.pop %v1586
        %v1588 = vmul.f32 %v1529, 1.442695
        %v1589 = vpow.pop %v1588
        %v1590 = vmul.f32 %v1530, 1.442695
        %v1591 = vpow.pop %v1590
        %v1592 = vmul.f32 %v1531, 1.442695
        %v1593 = vpow.pop %v1592
        %v1594 = vmul.f32 %v1532, 1.442695
        %v1595 = vpow.pop %v1594
        %v1596 = vmul.f32 %v1533, 1.442695
        %v1597 = vpow.pop %v1596
        %v1598 = vadd.f32 %v1535, %v1537
        %v1599 = vadd.f32 %v1598, %v1539
        %v1600 = vadd.f32 %v1599, %v1541
        %v1601 = vadd.f32 %v1600, %v1543
        %v1602 = vadd.f32 %v1601, %v1545
        %v1603 = vadd.f32 %v1602, %v1547
        %v1604 = vadd.f32 %v1603, %v1549
        %v1605 = vadd.f32 %v1604, %v1551
        %v1606 = vadd.f32 %v1605, %v1553
        %v1607 = vadd.f32 %v1606, %v1555
        %v1608 = vadd.f32 %v1607, %v1557
        %v1609 = vadd.f32 %v1608, %v1559
        %v1610 = vadd.f32 %v1609, %v1561
        %v1611 = vadd.f32 %v1610, %v1563
        %v1612 = vadd.f32 %v1611, %v1565
        %v1613 = vadd.f32 %v1612, %v1567
        %v1614 = vadd.f32 %v1613, %v1569
        %v1615 = vadd.f32 %v1614, %v1571
        %v1616 = vadd.f32 %v1615, %v1573
        %v1617 = vadd.f32 %v1616, %v1575
        %v1618 = vadd.f32 %v1617, %v1577
        %v1619 = vadd.f32 %v1618, %v1579
        %v1620 = vadd.f32 %v1619, %v1581
        %v1621 = vadd.f32 %v1620, %v1583
        %v1622 = vadd.f32 %v1621, %v1585
        %v1623 = vadd.f32 %v1622, %v1587
        %v1624 = vadd.f32 %v1623, %v1589
        %v1625 = vadd.f32 %v1624, %v1591
        %v1626 = vadd.f32 %v1625, %v1593
        %v1627 = vadd.f32 %v1626, %v1595
        %v1628 = vadd.f32 %v1627, %v1597
        %v1629 = vrot.slane %v1628, 4
        %v1630 = vadd.f32 %v1628, %v1629
        %v1631 = vrot.slane %v1630, 2
        %v1632 = vadd.f32 %v1630, %v1631
        %v1633 = vrot.slane %v1632, 1
        %v1634 = vadd.f32 %v1632, %v1633
        %v1635 = vrcp.pop %v1634
        %v1636 = vmul.f32 %v1535, %v1635
        %v1637 = vmul.f32 %v1537, %v1635
        %v1638 = vmul.f32 %v1539, %v1635
        %v1639 = vmul.f32 %v1541, %v1635
        %v1640 = vmul.f32 %v1543, %v1635
        %v1641 = vmul.f32 %v1545, %v1635
        %v1642 = vmul.f32 %v1547, %v1635
        %v1643 = vmul.f32 %v1549, %v1635
        %v1644 = vmul.f32 %v1551, %v1635
        %v1645 = vmul.f32 %v1553, %v1635
        %v1646 = vmul.f32 %v1555, %v1635
        %v1647 = vmul.f32 %v1557, %v1635
        %v1648 = vmul.f32 %v1559, %v1635
        %v1649 = vmul.f32 %v1561, %v1635
        %v1650 = vmul.f32 %v1563, %v1635
        %v1651 = vmul.f32 %v1565, %v1635
        %v1652 = vmul.f32 %v1567, %v1635
        %v1653 = vmul.f32 %v1569, %v1635
        %v1654 = vmul.f32 %v1571, %v1635
        %v1655 = vmul.f32 %v1573, %v1635
        %v1656 = vmul.f32 %v1575, %v1635
        %v1657 = vmul.f32 %v1577, %v1635
        %v1658 = vmul.f32 %v1579, %v1635
        %v1659 = vmul.f32 %v1581, %v1635
        %v1660 = vmul.f32 %v1583, %v1635
        %v1661 = vmul.f32 %v1585, %v1635
        %v1662 = vmul.f32 %v1587, %v1635
        %v1663 = vmul.f32 %v1589, %v1635
        %v1664 = vmul.f32 %v1591, %v1635
        %v1665 = vmul.f32 %v1593, %v1635
        %v1666 = vmul.f32 %v1595, %v1635
        %v1667 = vmul.f32 %v1597, %v1635
        %v1668 = vpack.c.bf16 %v1637, %v1636
        %v1669 = vpack.c.bf16 %v1639, %v1638
        %v1670 = vpack.c.bf16 %v1641, %v1640
        %v1671 = vpack.c.bf16 %v1643, %v1642
        %v1672 = vpack.c.bf16 %v1645, %v1644
        %v1673 = vpack.c.bf16 %v1647, %v1646
        %v1674 = vpack.c.bf16 %v1649, %v1648
        %v1675 = vpack.c.bf16 %v1651, %v1650
        %v1676 = vpack.c.bf16 %v1653, %v1652
        %v1677 = vpack.c.bf16 %v1655, %v1654
        %v1678 = vpack.c.bf16 %v1657, %v1656
        %v1679 = vpack.c.bf16 %v1659, %v1658
        %v1680 = vpack.c.bf16 %v1661, %v1660
        %v1681 = vpack.c.bf16 %v1663, %v1662
        %v1682 = vpack.c.bf16 %v1665, %v1664
        %v1683 = vpack.c.bf16 %v1667, %v1666
        %s1684 = smul.u32 %s31, 128
        %s1685 = scalar_lea.vmem %s318, %s1684 [#allocation5]
        %v1686 = vld [vmem:[%s1685] sm:$0xff]
        %v1687 = vld [vmem:[%s1685 + $0x8] sm:$0xff]
        %v1688 = vld [vmem:[%s1685 + $0x10] sm:$0xff]
        %v1689 = vld [vmem:[%s1685 + $0x18] sm:$0xff]
        %v1690 = vld [vmem:[%s1685 + $0x20] sm:$0xff]
        %v1691 = vld [vmem:[%s1685 + $0x28] sm:$0xff]
        %v1692 = vld [vmem:[%s1685 + $0x30] sm:$0xff]
        %v1693 = vld [vmem:[%s1685 + $0x38] sm:$0xff]
        %v1694 = vld [vmem:[%s1685 + $0x40] sm:$0xff]
        %v1695 = vld [vmem:[%s1685 + $0x48] sm:$0xff]
        %v1696 = vld [vmem:[%s1685 + $0x50] sm:$0xff]
        %v1697 = vld [vmem:[%s1685 + $0x58] sm:$0xff]
        %v1698 = vld [vmem:[%s1685 + $0x60] sm:$0xff]
        %v1699 = vld [vmem:[%s1685 + $0x68] sm:$0xff]
        %v1700 = vld [vmem:[%s1685 + $0x70] sm:$0xff]
        %v1701 = vld [vmem:[%s1685 + $0x78] sm:$0xff]
        %v1702 = vpack.c.bf16 %v1687, %v1686
        %v1703 = vpack.c.bf16 %v1689, %v1688
        %v1704 = vpack.c.bf16 %v1691, %v1690
        %v1705 = vpack.c.bf16 %v1693, %v1692
        %v1706 = vpack.c.bf16 %v1695, %v1694
        %v1707 = vpack.c.bf16 %v1697, %v1696
        %v1708 = vpack.c.bf16 %v1699, %v1698
        %v1709 = vpack.c.bf16 %v1701, %v1700
        %v1710 = vld [vmem:[%s6] sm:$0xf]
        %v1711 = vld [vmem:[%s6 + $0x4] sm:$0xf]
        %v1712 = vld [vmem:[%s6 + $0x8] sm:$0xf]
        %v1713 = vld [vmem:[%s6 + $0xc] sm:$0xf]
        %v1714 = vld [vmem:[%s6 + $0x10] sm:$0xf]
        %v1715 = vld [vmem:[%s6 + $0x14] sm:$0xf]
        %v1716 = vld [vmem:[%s6 + $0x18] sm:$0xf]
        %v1717 = vld [vmem:[%s6 + $0x1c] sm:$0xf]
        %v1718 = vld [vmem:[%s6 + $0x20] sm:$0xf]
        %v1719 = vld [vmem:[%s6 + $0x24] sm:$0xf]
        %v1720 = vld [vmem:[%s6 + $0x28] sm:$0xf]
        %v1721 = vld [vmem:[%s6 + $0x2c] sm:$0xf]
        %v1722 = vld [vmem:[%s6 + $0x30] sm:$0xf]
        %v1723 = vld [vmem:[%s6 + $0x34] sm:$0xf]
        %v1724 = vld [vmem:[%s6 + $0x38] sm:$0xf]
        %v1725 = vld [vmem:[%s6 + $0x3c] sm:$0xf]
        %v1742 = vunpack.c.l.b16 %v1710
        %v1743 = vunpack.c.l.b16 %v1711
        %v1744 = vunpack.c.l.b16 %v1712
        %v1745 = vunpack.c.l.b16 %v1713
        %v1746 = vunpack.c.l.b16 %v1714
        %v1747 = vunpack.c.l.b16 %v1715
        %v1748 = vunpack.c.l.b16 %v1716
        %v1749 = vunpack.c.l.b16 %v1717
        %v1750 = vunpack.c.l.b16 %v1718
        %v1751 = vunpack.c.l.b16 %v1719
        %v1752 = vunpack.c.l.b16 %v1720
        %v1753 = vunpack.c.l.b16 %v1721
        %v1754 = vunpack.c.l.b16 %v1722
        %v1755 = vunpack.c.l.b16 %v1723
        %v1756 = vunpack.c.l.b16 %v1724
        %v1757 = vunpack.c.l.b16 %v1725
        %v1758 = vpack.c.b16 %v1743, %v1742
        %v1759 = vpack.c.b16 %v1745, %v1744
        %v1760 = vpack.c.b16 %v1747, %v1746
        %v1761 = vpack.c.b16 %v1749, %v1748
        %v1762 = vpack.c.b16 %v1751, %v1750
        %v1763 = vpack.c.b16 %v1753, %v1752
        %v1764 = vpack.c.b16 %v1755, %v1754
        %v1765 = vpack.c.b16 %v1757, %v1756
        %1774 = vmatprep.subr.bf16.mxu0 0
        %1775 = vmatpush1.bf16.msra.mxu0 %v1758
        %1776 = vmatprep.subr.bf16.mxu0 0
        %1777 = vmatpush1.bf16.msra.mxu0 %v1759
        %1778 = vmatprep.subr.bf16.mxu0 0
        %1779 = vmatpush1.bf16.msra.mxu0 %v1760
        %1780 = vmatprep.subr.bf16.mxu0 0
        %1781 = vmatpush1.bf16.msra.mxu0 %v1761
        %1782 = vmatprep.subr.bf16.mxu0 0
        %1783 = vmatpush1.bf16.msra.mxu0 %v1762
        %1784 = vmatprep.subr.bf16.mxu0 0
        %1785 = vmatpush1.bf16.msra.mxu0 %v1763
        %1786 = vmatprep.subr.bf16.mxu0 0
        %1787 = vmatpush1.bf16.msra.mxu0 %v1764
        %1788 = vmatprep.subr.bf16.mxu0 0
        %1789 = vmatpush1.bf16.msra.mxu0 %v1765
        %1790 = vmatprep.subr.bf16.mxu0 0
        %1791 = vmatpush1.bf16.msra.mxu0 0
        %1792 = vmatprep.subr.bf16.mxu0 0
        %1793 = vmatpush1.bf16.msra.mxu0 0
        %1794 = vmatprep.subr.bf16.mxu0 0
        %1795 = vmatpush1.bf16.msra.mxu0 0
        %1796 = vmatprep.subr.bf16.mxu0 0
        %1797 = vmatpush1.bf16.msra.mxu0 0
        %1798 = vmatprep.subr.bf16.mxu0 0
        %1799 = vmatpush1.bf16.msra.mxu0 0
        %1800 = vmatprep.subr.bf16.mxu0 0
        %1801 = vmatpush1.bf16.msra.mxu0 0
        %1802 = vmatprep.subr.bf16.mxu0 0
        %1803 = vmatpush1.bf16.msra.mxu0 0
        %1804 = vmatprep.subr.bf16.mxu0 0
        %1805 = vmatpush1.bf16.msra.mxu0 0
        %1806 = vmatprep.mubr.bf16.mxu0 0
        %1807 = vmatmul.mubr.bf16.gmra.mrb[0].mxu0 %v1702
        %v1808 = vpop.f32.mrb[0].mxu0
        %v1809 = vadd.f32 0.0, %v1808
        %v1810 = vpop.f32.mrb[0].mxu0
        %v1811 = vpop.f32.mrb[0].mxu0
        %v1812 = vadd.f32 0.0, %v1811
        %v1813 = vpop.f32.mrb[0].mxu0
        %1814 = vmatprep.mubr.bf16.mxu0 0
        %1815 = vmatmul.mubr.bf16.gmra.mrb[0].mxu0 %v1703
        %v1816 = vpop.f32.mrb[0].mxu0
        %v1817 = vadd.f32 0.0, %v1816
        %v1818 = vpop.f32.mrb[0].mxu0
        %v1819 = vpop.f32.mrb[0].mxu0
        %v1820 = vadd.f32 0.0, %v1819
        %v1821 = vpop.f32.mrb[0].mxu0
        %1822 = vmatprep.mubr.bf16.mxu0 0
        %1823 = vmatmul.mubr.bf16.gmra.mrb[0].mxu0 %v1704
        %v1824 = vpop.f32.mrb[0].mxu0
        %v1825 = vadd.f32 0.0, %v1824
        %v1826 = vpop.f32.mrb[0].mxu0
        %v1827 = vpop.f32.mrb[0].mxu0
        %v1828 = vadd.f32 0.0, %v1827
        %v1829 = vpop.f32.mrb[0].mxu0
        %1830 = vmatprep.mubr.bf16.mxu0 0
        %1831 = vmatmul.mubr.bf16.gmra.mrb[0].mxu0 %v1705
        %v1832 = vpop.f32.mrb[0].mxu0
        %v1833 = vadd.f32 0.0, %v1832
        %v1834 = vpop.f32.mrb[0].mxu0
        %v1835 = vpop.f32.mrb[0].mxu0
        %v1836 = vadd.f32 0.0, %v1835
        %v1837 = vpop.f32.mrb[0].mxu0
        %1838 = vmatprep.mubr.bf16.mxu0 0
        %1839 = vmatmul.mubr.bf16.gmra.mrb[0].mxu0 %v1706
        %v1840 = vpop.f32.mrb[0].mxu0
        %v1841 = vadd.f32 0.0, %v1840
        %v1842 = vpop.f32.mrb[0].mxu0
        %v1843 = vpop.f32.mrb[0].mxu0
        %v1844 = vadd.f32 0.0, %v1843
        %v1845 = vpop.f32.mrb[0].mxu0
        %1846 = vmatprep.mubr.bf16.mxu0 0
        %1847 = vmatmul.mubr.bf16.gmra.mrb[0].mxu0 %v1707
        %v1848 = vpop.f32.mrb[0].mxu0
        %v1849 = vadd.f32 0.0, %v1848
        %v1850 = vpop.f32.mrb[0].mxu0
        %v1851 = vpop.f32.mrb[0].mxu0
        %v1852 = vadd.f32 0.0, %v1851
        %v1853 = vpop.f32.mrb[0].mxu0
        %1854 = vmatprep.mubr.bf16.mxu0 0
        %1855 = vmatmul.mubr.bf16.gmra.mrb[0].mxu0 %v1708
        %v1856 = vpop.f32.mrb[0].mxu0
        %v1857 = vadd.f32 0.0, %v1856
        %v1858 = vpop.f32.mrb[0].mxu0
        %v1859 = vpop.f32.mrb[0].mxu0
        %v1860 = vadd.f32 0.0, %v1859
        %v1861 = vpop.f32.mrb[0].mxu0
        %1862 = vmatprep.mubr.bf16.mxu0 0
        %1863 = vmatmul.mubr.bf16.gmra.mrb[0].mxu0 %v1709
        %v1864 = vpop.f32.mrb[0].mxu0
        %v1865 = vadd.f32 0.0, %v1864
        %v1866 = vpop.f32.mrb[0].mxu0
        %v1867 = vpop.f32.mrb[0].mxu0
        %v1868 = vadd.f32 0.0, %v1867
        %v1869 = vpop.f32.mrb[0].mxu0
        %1870 = vdwg.mxu0
        %v1871 = vpack.c.bf16 %v1812, %v1809
        %v1872 = vpack.c.bf16 %v1820, %v1817
        %v1873 = vpack.c.bf16 %v1828, %v1825
        %v1874 = vpack.c.bf16 %v1836, %v1833
        %v1875 = vpack.c.bf16 %v1844, %v1841
        %v1876 = vpack.c.bf16 %v1852, %v1849
        %v1877 = vpack.c.bf16 %v1860, %v1857
        %v1878 = vpack.c.bf16 %v1868, %v1865
        %v1879 = vld [vmem:[#allocation3] sm:$0xff]
        %v1880 = vld [vmem:[#allocation3 + $0x8] sm:$0xff]
        %v1881 = vld [vmem:[#allocation3 + $0x10] sm:$0xff]
        %v1882 = vld [vmem:[#allocation3 + $0x18] sm:$0xff]
        %v1883 = vld [vmem:[#allocation3 + $0x20] sm:$0xff]
        %v1884 = vld [vmem:[#allocation3 + $0x28] sm:$0xff]
        %v1885 = vld [vmem:[#allocation3 + $0x30] sm:$0xff]
        %v1886 = vld [vmem:[#allocation3 + $0x38] sm:$0xff]
        %v1887 = vld [vmem:[#allocation3 + $0x40] sm:$0xff]
        %v1888 = vld [vmem:[#allocation3 + $0x48] sm:$0xff]
        %v1889 = vld [vmem:[#allocation3 + $0x50] sm:$0xff]
        %v1890 = vld [vmem:[#allocation3 + $0x58] sm:$0xff]
        %v1891 = vld [vmem:[#allocation3 + $0x60] sm:$0xff]
        %v1892 = vld [vmem:[#allocation3 + $0x68] sm:$0xff]
        %v1893 = vld [vmem:[#allocation3 + $0x70] sm:$0xff]
        %v1894 = vld [vmem:[#allocation3 + $0x78] sm:$0xff]
        %v1895 = vld [vmem:[#allocation3 + $0x80] sm:$0xff]
        %v1896 = vld [vmem:[#allocation3 + $0x88] sm:$0xff]
        %v1897 = vld [vmem:[#allocation3 + $0x90] sm:$0xff]
        %v1898 = vld [vmem:[#allocation3 + $0x98] sm:$0xff]
        %v1899 = vld [vmem:[#allocation3 + $0xa0] sm:$0xff]
        %v1900 = vld [vmem:[#allocation3 + $0xa8] sm:$0xff]
        %v1901 = vld [vmem:[#allocation3 + $0xb0] sm:$0xff]
        %v1902 = vld [vmem:[#allocation3 + $0xb8] sm:$0xff]
        %v1903 = vld [vmem:[#allocation3 + $0xc0] sm:$0xff]
        %v1904 = vld [vmem:[#allocation3 + $0xc8] sm:$0xff]
        %v1905 = vld [vmem:[#allocation3 + $0xd0] sm:$0xff]
        %v1906 = vld [vmem:[#allocation3 + $0xd8] sm:$0xff]
        %v1907 = vld [vmem:[#allocation3 + $0xe0] sm:$0xff]
        %v1908 = vld [vmem:[#allocation3 + $0xe8] sm:$0xff]
        %v1909 = vld [vmem:[#allocation3 + $0xf0] sm:$0xff]
        %v1910 = vld [vmem:[#allocation3 + $0xf8] sm:$0xff]
        %1911 = vmatprep.subr.bf16.mxu0 0
        %1912 = vmatpush1.bf16.msra.mxu0 %v1871
        %1913 = vmatprep.subr.bf16.mxu0 0
        %1914 = vmatpush1.bf16.msra.mxu0 %v1872
        %1915 = vmatprep.subr.bf16.mxu0 0
        %1916 = vmatpush1.bf16.msra.mxu0 %v1873
        %1917 = vmatprep.subr.bf16.mxu0 0
        %1918 = vmatpush1.bf16.msra.mxu0 %v1874
        %1919 = vmatprep.subr.bf16.mxu0 0
        %1920 = vmatpush1.bf16.msra.mxu0 %v1875
        %1921 = vmatprep.subr.bf16.mxu0 0
        %1922 = vmatpush1.bf16.msra.mxu0 %v1876
        %1923 = vmatprep.subr.bf16.mxu0 0
        %1924 = vmatpush1.bf16.msra.mxu0 %v1877
        %1925 = vmatprep.subr.bf16.mxu0 0
        %1926 = vmatpush1.bf16.msra.mxu0 %v1878
        %1927 = vmatprep.subr.bf16.mxu0 0
        %1928 = vmatpush1.bf16.msra.mxu0 0
        %1929 = vmatprep.subr.bf16.mxu0 0
        %1930 = vmatpush1.bf16.msra.mxu0 0
        %1931 = vmatprep.subr.bf16.mxu0 0
        %1932 = vmatpush1.bf16.msra.mxu0 0
        %1933 = vmatprep.subr.bf16.mxu0 0
        %1934 = vmatpush1.bf16.msra.mxu0 0
        %1935 = vmatprep.subr.bf16.mxu0 0
        %1936 = vmatpush1.bf16.msra.mxu0 0
        %1937 = vmatprep.subr.bf16.mxu0 0
        %1938 = vmatpush1.bf16.msra.mxu0 0
        %1939 = vmatprep.subr.bf16.mxu0 0
        %1940 = vmatpush1.bf16.msra.mxu0 0
        %1941 = vmatprep.subr.bf16.mxu0 0
        %1942 = vmatpush1.bf16.msra.mxu0 0
        %1943 = vmatprep.mubr.bf16.mxu0 0
        %1944 = vmatmul.mubr.bf16.gmra.mrb[0].mxu0 %v1668
        %v1945 = vpop.f32.mrb[0].mxu0
        %v1946 = vadd.f32 0.0, %v1945
        %v1947 = vpop.f32.mrb[0].mxu0
        %v1948 = vpop.f32.mrb[0].mxu0
        %v1949 = vadd.f32 0.0, %v1948
        %v1950 = vpop.f32.mrb[0].mxu0
        %1951 = vmatprep.mubr.bf16.mxu0 0
        %1952 = vmatmul.mubr.bf16.gmra.mrb[0].mxu0 %v1669
        %v1953 = vpop.f32.mrb[0].mxu0
        %v1954 = vadd.f32 0.0, %v1953
        %v1955 = vpop.f32.mrb[0].mxu0
        %v1956 = vpop.f32.mrb[0].mxu0
        %v1957 = vadd.f32 0.0, %v1956
        %v1958 = vpop.f32.mrb[0].mxu0
        %1959 = vmatprep.mubr.bf16.mxu0 0
        %1960 = vmatmul.mubr.bf16.gmra.mrb[0].mxu0 %v1670
        %v1961 = vpop.f32.mrb[0].mxu0
        %v1962 = vadd.f32 0.0, %v1961
        %v1963 = vpop.f32.mrb[0].mxu0
        %v1964 = vpop.f32.mrb[0].mxu0
        %v1965 = vadd.f32 0.0, %v1964
        %v1966 = vpop.f32.mrb[0].mxu0
        %1967 = vmatprep.mubr.bf16.mxu0 0
        %1968 = vmatmul.mubr.bf16.gmra.mrb[0].mxu0 %v1671
        %v1969 = vpop.f32.mrb[0].mxu0
        %v1970 = vadd.f32 0.0, %v1969
        %v1971 = vpop.f32.mrb[0].mxu0
        %v1972 = vpop.f32.mrb[0].mxu0
        %v1973 = vadd.f32 0.0, %v1972
        %v1974 = vpop.f32.mrb[0].mxu0
        %1975 = vmatprep.mubr.bf16.mxu0 0
        %1976 = vmatmul.mubr.bf16.gmra.mrb[0].mxu0 %v1672
        %v1977 = vpop.f32.mrb[0].mxu0
        %v1978 = vadd.f32 0.0, %v1977
        %v1979 = vpop.f32.mrb[0].mxu0
        %v1980 = vpop.f32.mrb[0].mxu0
        %v1981 = vadd.f32 0.0, %v1980
        %v1982 = vpop.f32.mrb[0].mxu0
        %1983 = vmatprep.mubr.bf16.mxu0 0
        %1984 = vmatmul.mubr.bf16.gmra.mrb[0].mxu0 %v1673
        %v1985 = vpop.f32.mrb[0].mxu0
        %v1986 = vadd.f32 0.0, %v1985
        %v1987 = vpop.f32.mrb[0].mxu0
        %v1988 = vpop.f32.mrb[0].mxu0
        %v1989 = vadd.f32 0.0, %v1988
        %v1990 = vpop.f32.mrb[0].mxu0
        %1991 = vmatprep.mubr.bf16.mxu0 0
        %1992 = vmatmul.mubr.bf16.gmra.mrb[0].mxu0 %v1674
        %v1993 = vpop.f32.mrb[0].mxu0
        %v1994 = vadd.f32 0.0, %v1993
        %v1995 = vpop.f32.mrb[0].mxu0
        %v1996 = vpop.f32.mrb[0].mxu0
        %v1997 = vadd.f32 0.0, %v1996
        %v1998 = vpop.f32.mrb[0].mxu0
        %1999 = vmatprep.mubr.bf16.mxu0 0
        %2000 = vmatmul.mubr.bf16.gmra.mrb[0].mxu0 %v1675
        %v2001 = vpop.f32.mrb[0].mxu0
        %v2002 = vadd.f32 0.0, %v2001
        %v2003 = vpop.f32.mrb[0].mxu0
        %v2004 = vpop.f32.mrb[0].mxu0
        %v2005 = vadd.f32 0.0, %v2004
        %v2006 = vpop.f32.mrb[0].mxu0
        %2007 = vmatprep.mubr.bf16.mxu0 0
        %2008 = vmatmul.mubr.bf16.gmra.mrb[0].mxu0 %v1676
        %v2009 = vpop.f32.mrb[0].mxu0
        %v2010 = vadd.f32 0.0, %v2009
        %v2011 = vpop.f32.mrb[0].mxu0
        %v2012 = vpop.f32.mrb[0].mxu0
        %v2013 = vadd.f32 0.0, %v2012
        %v2014 = vpop.f32.mrb[0].mxu0
        %2015 = vmatprep.mubr.bf16.mxu0 0
        %2016 = vmatmul.mubr.bf16.gmra.mrb[0].mxu0 %v1677
        %v2017 = vpop.f32.mrb[0].mxu0
        %v2018 = vadd.f32 0.0, %v2017
        %v2019 = vpop.f32.mrb[0].mxu0
        %v2020 = vpop.f32.mrb[0].mxu0
        %v2021 = vadd.f32 0.0, %v2020
        %v2022 = vpop.f32.mrb[0].mxu0
        %2023 = vmatprep.mubr.bf16.mxu0 0
        %2024 = vmatmul.mubr.bf16.gmra.mrb[0].mxu0 %v1678
        %v2025 = vpop.f32.mrb[0].mxu0
        %v2026 = vadd.f32 0.0, %v2025
        %v2027 = vpop.f32.mrb[0].mxu0
        %v2028 = vpop.f32.mrb[0].mxu0
        %v2029 = vadd.f32 0.0, %v2028
        %v2030 = vpop.f32.mrb[0].mxu0
        %2031 = vmatprep.mubr.bf16.mxu0 0
        %2032 = vmatmul.mubr.bf16.gmra.mrb[0].mxu0 %v1679
        %v2033 = vpop.f32.mrb[0].mxu0
        %v2034 = vadd.f32 0.0, %v2033
        %v2035 = vpop.f32.mrb[0].mxu0
        %v2036 = vpop.f32.mrb[0].mxu0
        %v2037 = vadd.f32 0.0, %v2036
        %v2038 = vpop.f32.mrb[0].mxu0
        %2039 = vmatprep.mubr.bf16.mxu0 0
        %2040 = vmatmul.mubr.bf16.gmra.mrb[0].mxu0 %v1680
        %v2041 = vpop.f32.mrb[0].mxu0
        %v2042 = vadd.f32 0.0, %v2041
        %v2043 = vpop.f32.mrb[0].mxu0
        %v2044 = vpop.f32.mrb[0].mxu0
        %v2045 = vadd.f32 0.0, %v2044
        %v2046 = vpop.f32.mrb[0].mxu0
        %2047 = vmatprep.mubr.bf16.mxu0 0
        %2048 = vmatmul.mubr.bf16.gmra.mrb[0].mxu0 %v1681
        %v2049 = vpop.f32.mrb[0].mxu0
        %v2050 = vadd.f32 0.0, %v2049
        %v2051 = vpop.f32.mrb[0].mxu0
        %v2052 = vpop.f32.mrb[0].mxu0
        %v2053 = vadd.f32 0.0, %v2052
        %v2054 = vpop.f32.mrb[0].mxu0
        %2055 = vmatprep.mubr.bf16.mxu0 0
        %2056 = vmatmul.mubr.bf16.gmra.mrb[0].mxu0 %v1682
        %v2057 = vpop.f32.mrb[0].mxu0
        %v2058 = vadd.f32 0.0, %v2057
        %v2059 = vpop.f32.mrb[0].mxu0
        %v2060 = vpop.f32.mrb[0].mxu0
        %v2061 = vadd.f32 0.0, %v2060
        %v2062 = vpop.f32.mrb[0].mxu0
        %2063 = vmatprep.mubr.bf16.mxu0 0
        %2064 = vmatmul.mubr.bf16.gmra.mrb[0].mxu0 %v1683
        %v2065 = vpop.f32.mrb[0].mxu0
        %v2066 = vadd.f32 0.0, %v2065
        %v2067 = vpop.f32.mrb[0].mxu0
        %v2068 = vpop.f32.mrb[0].mxu0
        %v2069 = vadd.f32 0.0, %v2068
        %v2070 = vpop.f32.mrb[0].mxu0
        %2071 = vdwg.mxu0
        %v2072 = vadd.f32 %v1879, %v1946
        %v2073 = vadd.f32 %v1880, %v1949
        %v2074 = vadd.f32 %v1881, %v1954
        %v2075 = vadd.f32 %v1882, %v1957
        %v2076 = vadd.f32 %v1883, %v1962
        %v2077 = vadd.f32 %v1884, %v1965
        %v2078 = vadd.f32 %v1885, %v1970
        %v2079 = vadd.f32 %v1886, %v1973
        %v2080 = vadd.f32 %v1887, %v1978
        %v2081 = vadd.f32 %v1888, %v1981
        %v2082 = vadd.f32 %v1889, %v1986
        %v2083 = vadd.f32 %v1890, %v1989
        %v2084 = vadd.f32 %v1891, %v1994
        %v2085 = vadd.f32 %v1892, %v1997
        %v2086 = vadd.f32 %v1893, %v2002
        %v2087 = vadd.f32 %v1894, %v2005
        %v2088 = vadd.f32 %v1895, %v2010
        %v2089 = vadd.f32 %v1896, %v2013
        %v2090 = vadd.f32 %v1897, %v2018
        %v2091 = vadd.f32 %v1898, %v2021
        %v2092 = vadd.f32 %v1899, %v2026
        %v2093 = vadd.f32 %v1900, %v2029
        %v2094 = vadd.f32 %v1901, %v2034
        %v2095 = vadd.f32 %v1902, %v2037
        %v2096 = vadd.f32 %v1903, %v2042
        %v2097 = vadd.f32 %v1904, %v2045
        %v2098 = vadd.f32 %v1905, %v2050
        %v2099 = vadd.f32 %v1906, %v2053
        %v2100 = vadd.f32 %v1907, %v2058
        %v2101 = vadd.f32 %v1908, %v2061
        %v2102 = vadd.f32 %v1909, %v2066
        %v2103 = vadd.f32 %v1910, %v2069
        %2104 = vst [vmem:[#allocation3] sm:$0xff] %v2072
        %2105 = vst [vmem:[#allocation3 + $0x8] sm:$0xff] %v2073
        %2106 = vst [vmem:[#allocation3 + $0x10] sm:$0xff] %v2074
        %2107 = vst [vmem:[#allocation3 + $0x18] sm:$0xff] %v2075
        %2108 = vst [vmem:[#allocation3 + $0x20] sm:$0xff] %v2076
        %2109 = vst [vmem:[#allocation3 + $0x28] sm:$0xff] %v2077
        %2110 = vst [vmem:[#allocation3 + $0x30] sm:$0xff] %v2078
        %2111 = vst [vmem:[#allocation3 + $0x38] sm:$0xff] %v2079
        %2112 = vst [vmem:[#allocation3 + $0x40] sm:$0xff] %v2080
        %2113 = vst [vmem:[#allocation3 + $0x48] sm:$0xff] %v2081
        %2114 = vst [vmem:[#allocation3 + $0x50] sm:$0xff] %v2082
        %2115 = vst [vmem:[#allocation3 + $0x58] sm:$0xff] %v2083
        %2116 = vst [vmem:[#allocation3 + $0x60] sm:$0xff] %v2084
        %2117 = vst [vmem:[#allocation3 + $0x68] sm:$0xff] %v2085
        %2118 = vst [vmem:[#allocation3 + $0x70] sm:$0xff] %v2086
        %2119 = vst [vmem:[#allocation3 + $0x78] sm:$0xff] %v2087
        %2120 = vst [vmem:[#allocation3 + $0x80] sm:$0xff] %v2088
        %2121 = vst [vmem:[#allocation3 + $0x88] sm:$0xff] %v2089
        %2122 = vst [vmem:[#allocation3 + $0x90] sm:$0xff] %v2090
        %2123 = vst [vmem:[#allocation3 + $0x98] sm:$0xff] %v2091
        %2124 = vst [vmem:[#allocation3 + $0xa0] sm:$0xff] %v2092
        %2125 = vst [vmem:[#allocation3 + $0xa8] sm:$0xff] %v2093
        %2126 = vst [vmem:[#allocation3 + $0xb0] sm:$0xff] %v2094
        %2127 = vst [vmem:[#allocation3 + $0xb8] sm:$0xff] %v2095
        %2128 = vst [vmem:[#allocation3 + $0xc0] sm:$0xff] %v2096
        %2129 = vst [vmem:[#allocation3 + $0xc8] sm:$0xff] %v2097
        %2130 = vst [vmem:[#allocation3 + $0xd0] sm:$0xff] %v2098
        %2131 = vst [vmem:[#allocation3 + $0xd8] sm:$0xff] %v2099
        %2132 = vst [vmem:[#allocation3 + $0xe0] sm:$0xff] %v2100
        %2133 = vst [vmem:[#allocation3 + $0xe8] sm:$0xff] %v2101
        %2134 = vst [vmem:[#allocation3 + $0xf0] sm:$0xff] %v2102
        %2135 = vst [vmem:[#allocation3 + $0xf8] sm:$0xff] %v2103
        %p2136 = scmp.eq.s32.totalorder %s31, 1
        // Predicated region
        $region61: #{tpu_custom_call.1} parent=51 // pred_check
          %p2137 = pneg %p2136
        $region62: #{tpu_custom_call.1} parent=51 // pred_check_branch
          %2139 = sbr.rel (%p2137) target = $region64
        $region63: #{tpu_custom_call.1} parent=51 // pred_region
          %s2140 = sld [smem:[#allocation4]]
          %v2141 = vld [vmem:[#allocation3] sm:$0xff]
          %v2142 = vld [vmem:[#allocation3 + $0x8] sm:$0xff]
          %v2143 = vld [vmem:[#allocation3 + $0x10] sm:$0xff]
          %v2144 = vld [vmem:[#allocation3 + $0x18] sm:$0xff]
          %v2145 = vld [vmem:[#allocation3 + $0x20] sm:$0xff]
          %v2146 = vld [vmem:[#allocation3 + $0x28] sm:$0xff]
          %v2147 = vld [vmem:[#allocation3 + $0x30] sm:$0xff]
          %v2148 = vld [vmem:[#allocation3 + $0x38] sm:$0xff]
          %v2149 = vld [vmem:[#allocation3 + $0x40] sm:$0xff]
          %v2150 = vld [vmem:[#allocation3 + $0x48] sm:$0xff]
          %v2151 = vld [vmem:[#allocation3 + $0x50] sm:$0xff]
          %v2152 = vld [vmem:[#allocation3 + $0x58] sm:$0xff]
          %v2153 = vld [vmem:[#allocation3 + $0x60] sm:$0xff]
          %v2154 = vld [vmem:[#allocation3 + $0x68] sm:$0xff]
          %v2155 = vld [vmem:[#allocation3 + $0x70] sm:$0xff]
          %v2156 = vld [vmem:[#allocation3 + $0x78] sm:$0xff]
          %v2157 = vld [vmem:[#allocation3 + $0x80] sm:$0xff]
          %v2158 = vld [vmem:[#allocation3 + $0x88] sm:$0xff]
          %v2159 = vld [vmem:[#allocation3 + $0x90] sm:$0xff]
          %v2160 = vld [vmem:[#allocation3 + $0x98] sm:$0xff]
          %v2161 = vld [vmem:[#allocation3 + $0xa0] sm:$0xff]
          %v2162 = vld [vmem:[#allocation3 + $0xa8] sm:$0xff]
          %v2163 = vld [vmem:[#allocation3 + $0xb0] sm:$0xff]
          %v2164 = vld [vmem:[#allocation3 + $0xb8] sm:$0xff]
          %v2165 = vld [vmem:[#allocation3 + $0xc0] sm:$0xff]
          %v2166 = vld [vmem:[#allocation3 + $0xc8] sm:$0xff]
          %v2167 = vld [vmem:[#allocation3 + $0xd0] sm:$0xff]
          %v2168 = vld [vmem:[#allocation3 + $0xd8] sm:$0xff]
          %v2169 = vld [vmem:[#allocation3 + $0xe0] sm:$0xff]
          %v2170 = vld [vmem:[#allocation3 + $0xe8] sm:$0xff]
          %v2171 = vld [vmem:[#allocation3 + $0xf0] sm:$0xff]
          %v2172 = vld [vmem:[#allocation3 + $0xf8] sm:$0xff]
          %v2173 = vstv %s2140
          %v2174 = vmul.f32 %v2173, %v2141
          %v2175 = vmul.f32 %v2173, %v2142
          %v2176 = vmul.f32 %v2173, %v2143
          %v2177 = vmul.f32 %v2173, %v2144
          %v2178 = vmul.f32 %v2173, %v2145
          %v2179 = vmul.f32 %v2173, %v2146
          %v2180 = vmul.f32 %v2173, %v2147
          %v2181 = vmul.f32 %v2173, %v2148
          %v2182 = vmul.f32 %v2173, %v2149
          %v2183 = vmul.f32 %v2173, %v2150
          %v2184 = vmul.f32 %v2173, %v2151
          %v2185 = vmul.f32 %v2173, %v2152
          %v2186 = vmul.f32 %v2173, %v2153
          %v2187 = vmul.f32 %v2173, %v2154
          %v2188 = vmul.f32 %v2173, %v2155
          %v2189 = vmul.f32 %v2173, %v2156
          %v2190 = vmul.f32 %v2173, %v2157
          %v2191 = vmul.f32 %v2173, %v2158
          %v2192 = vmul.f32 %v2173, %v2159
          %v2193 = vmul.f32 %v2173, %v2160
          %v2194 = vmul.f32 %v2173, %v2161
          %v2195 = vmul.f32 %v2173, %v2162
          %v2196 = vmul.f32 %v2173, %v2163
          %v2197 = vmul.f32 %v2173, %v2164
          %v2198 = vmul.f32 %v2173, %v2165
          %v2199 = vmul.f32 %v2173, %v2166
          %v2200 = vmul.f32 %v2173, %v2167
          %v2201 = vmul.f32 %v2173, %v2168
          %v2202 = vmul.f32 %v2173, %v2169
          %v2203 = vmul.f32 %v2173, %v2170
          %v2204 = vmul.f32 %v2173, %v2171
          %v2205 = vmul.f32 %v2173, %v2172
          %v2206 = vld [vmem:[%s318] sm:$0xff]
          %v2207 = vld [vmem:[%s318 + $0x8] sm:$0xff]
          %v2208 = vld [vmem:[%s318 + $0x10] sm:$0xff]
          %v2209 = vld [vmem:[%s318 + $0x18] sm:$0xff]
          %v2210 = vld [vmem:[%s318 + $0x20] sm:$0xff]
          %v2211 = vld [vmem:[%s318 + $0x28] sm:$0xff]
          %v2212 = vld [vmem:[%s318 + $0x30] sm:$0xff]
          %v2213 = vld [vmem:[%s318 + $0x38] sm:$0xff]
          %v2214 = vld [vmem:[%s318 + $0x40] sm:$0xff]
          %v2215 = vld [vmem:[%s318 + $0x48] sm:$0xff]
          %v2216 = vld [vmem:[%s318 + $0x50] sm:$0xff]
          %v2217 = vld [vmem:[%s318 + $0x58] sm:$0xff]
          %v2218 = vld [vmem:[%s318 + $0x60] sm:$0xff]
          %v2219 = vld [vmem:[%s318 + $0x68] sm:$0xff]
          %v2220 = vld [vmem:[%s318 + $0x70] sm:$0xff]
          %v2221 = vld [vmem:[%s318 + $0x78] sm:$0xff]
          %v2222 = vld [vmem:[%s318 + $0x80] sm:$0xff]
          %v2223 = vld [vmem:[%s318 + $0x88] sm:$0xff]
          %v2224 = vld [vmem:[%s318 + $0x90] sm:$0xff]
          %v2225 = vld [vmem:[%s318 + $0x98] sm:$0xff]
          %v2226 = vld [vmem:[%s318 + $0xa0] sm:$0xff]
          %v2227 = vld [vmem:[%s318 + $0xa8] sm:$0xff]
          %v2228 = vld [vmem:[%s318 + $0xb0] sm:$0xff]
          %v2229 = vld [vmem:[%s318 + $0xb8] sm:$0xff]
          %v2230 = vld [vmem:[%s318 + $0xc0] sm:$0xff]
          %v2231 = vld [vmem:[%s318 + $0xc8] sm:$0xff]
          %v2232 = vld [vmem:[%s318 + $0xd0] sm:$0xff]
          %v2233 = vld [vmem:[%s318 + $0xd8] sm:$0xff]
          %v2234 = vld [vmem:[%s318 + $0xe0] sm:$0xff]
          %v2235 = vld [vmem:[%s318 + $0xe8] sm:$0xff]
          %v2236 = vld [vmem:[%s318 + $0xf0] sm:$0xff]
          %v2237 = vld [vmem:[%s318 + $0xf8] sm:$0xff]
          %v2238 = vadd.f32 %v2174, %v2206
          %v2239 = vadd.f32 %v2175, %v2207
          %v2240 = vadd.f32 %v2176, %v2208
          %v2241 = vadd.f32 %v2177, %v2209
          %v2242 = vadd.f32 %v2178, %v2210
          %v2243 = vadd.f32 %v2179, %v2211
          %v2244 = vadd.f32 %v2180, %v2212
          %v2245 = vadd.f32 %v2181, %v2213
          %v2246 = vadd.f32 %v2182, %v2214
          %v2247 = vadd.f32 %v2183, %v2215
          %v2248 = vadd.f32 %v2184, %v2216
          %v2249 = vadd.f32 %v2185, %v2217
          %v2250 = vadd.f32 %v2186, %v2218
          %v2251 = vadd.f32 %v2187, %v2219
          %v2252 = vadd.f32 %v2188, %v2220
          %v2253 = vadd.f32 %v2189, %v2221
          %v2254 = vadd.f32 %v2190, %v2222
          %v2255 = vadd.f32 %v2191, %v2223
          %v2256 = vadd.f32 %v2192, %v2224
          %v2257 = vadd.f32 %v2193, %v2225
          %v2258 = vadd.f32 %v2194, %v2226
          %v2259 = vadd.f32 %v2195, %v2227
          %v2260 = vadd.f32 %v2196, %v2228
          %v2261 = vadd.f32 %v2197, %v2229
          %v2262 = vadd.f32 %v2198, %v2230
          %v2263 = vadd.f32 %v2199, %v2231
          %v2264 = vadd.f32 %v2200, %v2232
          %v2265 = vadd.f32 %v2201, %v2233
          %v2266 = vadd.f32 %v2202, %v2234
          %v2267 = vadd.f32 %v2203, %v2235
          %v2268 = vadd.f32 %v2204, %v2236
          %v2269 = vadd.f32 %v2205, %v2237
          %2270 = vst [vmem:[%s357] sm:$0xff] %v2238
          %2271 = vst [vmem:[%s357 + $0x8] sm:$0xff] %v2239
          %2272 = vst [vmem:[%s357 + $0x10] sm:$0xff] %v2240
          %2273 = vst [vmem:[%s357 + $0x18] sm:$0xff] %v2241
          %2274 = vst [vmem:[%s357 + $0x20] sm:$0xff] %v2242
          %2275 = vst [vmem:[%s357 + $0x28] sm:$0xff] %v2243
          %2276 = vst [vmem:[%s357 + $0x30] sm:$0xff] %v2244
          %2277 = vst [vmem:[%s357 + $0x38] sm:$0xff] %v2245
          %2278 = vst [vmem:[%s357 + $0x40] sm:$0xff] %v2246
          %2279 = vst [vmem:[%s357 + $0x48] sm:$0xff] %v2247
          %2280 = vst [vmem:[%s357 + $0x50] sm:$0xff] %v2248
          %2281 = vst [vmem:[%s357 + $0x58] sm:$0xff] %v2249
          %2282 = vst [vmem:[%s357 + $0x60] sm:$0xff] %v2250
          %2283 = vst [vmem:[%s357 + $0x68] sm:$0xff] %v2251
          %2284 = vst [vmem:[%s357 + $0x70] sm:$0xff] %v2252
          %2285 = vst [vmem:[%s357 + $0x78] sm:$0xff] %v2253
          %2286 = vst [vmem:[%s357 + $0x80] sm:$0xff] %v2254
          %2287 = vst [vmem:[%s357 + $0x88] sm:$0xff] %v2255
          %2288 = vst [vmem:[%s357 + $0x90] sm:$0xff] %v2256
          %2289 = vst [vmem:[%s357 + $0x98] sm:$0xff] %v2257
          %2290 = vst [vmem:[%s357 + $0xa0] sm:$0xff] %v2258
          %2291 = vst [vmem:[%s357 + $0xa8] sm:$0xff] %v2259
          %2292 = vst [vmem:[%s357 + $0xb0] sm:$0xff] %v2260
          %2293 = vst [vmem:[%s357 + $0xb8] sm:$0xff] %v2261
          %2294 = vst [vmem:[%s357 + $0xc0] sm:$0xff] %v2262
          %2295 = vst [vmem:[%s357 + $0xc8] sm:$0xff] %v2263
          %2296 = vst [vmem:[%s357 + $0xd0] sm:$0xff] %v2264
          %2297 = vst [vmem:[%s357 + $0xd8] sm:$0xff] %v2265
          %2298 = vst [vmem:[%s357 + $0xe0] sm:$0xff] %v2266
          %2299 = vst [vmem:[%s357 + $0xe8] sm:$0xff] %v2267
          %2300 = vst [vmem:[%s357 + $0xf0] sm:$0xff] %v2268
          %2301 = vst [vmem:[%s357 + $0xf8] sm:$0xff] %v2269
        $region64: #{tpu_custom_call.1} parent=51 // pred_fallthru
          _
        %s2302 = sand.u32 %s226, 1
        %s2303 = scalar_lea.sflag [#allocation7], %s2302
        %s2304 = sand.u32 %s226, 1
        %s2305 = smul.addr %s2304, 256
        %s2306 = scalar_lea.vmem [#allocation8], %s2305
        // Predicated region
        $region65: #{tpu_custom_call.1} parent=51 // pred_check
          %p2307 = pneg %p236
        $region66: #{tpu_custom_call.1} parent=51 // pred_check_branch
          %2309 = sbr.rel (%p2307) target = $region68
        $region67: #{tpu_custom_call.1} parent=51 // pred_region
          %s2311 = ssub.s32 4096, 4096
          %2312 = vsyncadd %s2303, %s2311
          %s2313 = smul.addr %s30, 32
          %s2314 = smul.addr %s2313, 128
          %s2315 = scalar_lea.hbm %s8, %s2314
          %s2316 = sshll.u32 %s2306, 4
          %s2317 = int_to_ptr.vmem [resolvable:$true] %s2316
          %2322 = dma.vmem_to_hbm [thread:$0]  %s2317, 4096, %s2315, %s2303, 128, 128, 8
        $region68: #{tpu_custom_call.1} parent=51 // pred_fallthru
          _
      $region52: #{tpu_custom_call.1} parent=5 // pred_fallthru
        _
      %p2323 = scmp.le.s32.totalorder 2, %s21
      // Predicated region
      $region69: #{tpu_custom_call.1} parent=5 // pred_check
        %p2324 = pneg %p2323
      $region70: #{tpu_custom_call.1} parent=5 // pred_check_branch
        %2326 = sbr.rel (%p2324) target = $region72
      $region71: #{tpu_custom_call.1} parent=5 // pred_region
        %s2327 = ssub.s32 %s21, 2
        // Predicated region
        $region73: #{tpu_custom_call.1} parent=71 // pred_check
          %p2328 = pneg %p242
        $region74: #{tpu_custom_call.1} parent=71 // pred_check_branch
          %2330 = sbr.rel (%p2328) target = $region76
        $region75: #{tpu_custom_call.1} parent=71 // pred_region
          %s2331 = sand.u32 %s227, 1
          %s2332 = scalar_lea.sflag [#allocation7], %s2331
          %s2333 = sand.u32 %s227, 1
          %s2334 = smul.addr %s2333, 256
          %s2335 = scalar_lea.vmem [#allocation8], %s2334
          %2336 = dma.done %s2332, 4096
        $region76: #{tpu_custom_call.1} parent=71 // pred_fallthru
          _
      $region72: #{tpu_custom_call.1} parent=5 // pred_fallthru
        _
    $region6: #{tpu_custom_call.1} parent=1 // loop_footer
      %s25 = sadd.s32 1, %s21
    $region7: #{tpu_custom_call.1} parent=1 // loop_footer_branch
      %20 = sbr.rel target = $region3
    $region8: #{tpu_custom_call.1} parent=1 // loop_exit
      _
    %2337 = vsyncpa [#allocation6], 1
    %s2338 = scalar_lea.sflag [#allocation6], 1
    %2339 = vsyncpa %s2338, 1
    %2340 = vsyncpa [#allocation7], 1
    %s2341 = scalar_lea.sflag [#allocation7], 1
    %2342 = vsyncpa %s2341, 1

</llo_original>
